<compile_context>
chip_gen: v5e
topology: v5e:2x2
jax: 0.10.0
libtpu: 0.0.40
codegen_flags: <defaults>
</compile_context>

<pallas_src>
import functools

import jax
import jax.numpy as jnp
from jax.experimental import pallas as pl
from jax.experimental.pallas import tpu as pltpu

_LANE = 128
_MIB = 1024 * 1024
# Resident-Z budget (counts a possible double buffer); keeps total VMEM comfortably
# inside v7x's 64 MiB together with A/X/out pipeline buffers and scratch.
_RESIDENT_Z_BYTES = 16 * _MIB


def _round_up(x, m):
    return (x + m - 1) // m * m


def _pick_tile(n_pad, want_multi):
    """Largest 128-multiple tile (<=512) dividing n_pad; optionally keep >=2 tiles."""
    for t in (512, 256, 128):
        if n_pad % t:
            continue
        if want_multi and n_pad > 128 and n_pad // t < 2:
            continue
        return t
    return 128


def _vmem_limit(need_bytes):
    # actual footprint + 25% + 8 MiB headroom for compiler internal scratch,
    # capped below v7x's 64 MiB physical VMEM.
    return int(min(need_bytes * 5 // 4 + 8 * _MIB, 48 * _MIB))


# ----------------------------------------------------------------------------
# Kernel 1: neighbor projection  Z = X @ W_neigh   (row-tiled matmul)
# ----------------------------------------------------------------------------
def _project_kernel(x_ref, w_ref, o_ref):
    o_ref[...] = jnp.dot(x_ref[...], w_ref[...],
                         preferred_element_type=jnp.float32).astype(o_ref.dtype)


def project_neighbors(x, w_neigh, *, tm):
    """x: [N, Fi] bf16, w_neigh: [Fi, Fo] bf16 -> Z: [N, Fo] bf16."""
    n, f_in = x.shape
    f_out = w_neigh.shape[1]
    grid = (n // tm,)

    need = (2 * tm * f_in * 2          # X tiles, double-buffered
            + 2 * f_in * f_out * 2     # resident weights (double-buffer worst case)
            + 2 * tm * f_out * 2)      # output tiles
    flops = 2 * n * f_in * f_out
    bytes_accessed = (n * f_in + f_in * f_out + n * f_out) * 2

    return pl.pallas_call(
        _project_kernel,
        out_shape=jax.ShapeDtypeStruct((n, f_out), jnp.bfloat16),
        grid_spec=pltpu.PrefetchScalarGridSpec(
            num_scalar_prefetch=0,
            grid=grid,
            in_specs=[
                pl.BlockSpec((tm, f_in), lambda m: (m, 0)),
                pl.BlockSpec((f_in, f_out), lambda m: (0, 0)),
            ],
            out_specs=pl.BlockSpec((tm, f_out), lambda m: (m, 0)),
        ),
        compiler_params=pltpu.CompilerParams(
            dimension_semantics=("parallel",),
            vmem_limit_bytes=_vmem_limit(need),
        ),
        cost_estimate=pl.CostEstimate(flops=flops, transcendentals=0,
                                      bytes_accessed=bytes_accessed),
    )(x, w_neigh)


# ----------------------------------------------------------------------------
# Kernel 2: mean aggregation + self projection + bias (+ReLU)
#   out[m] = sum_k A[m,k] @ Z[k]  +  X[m] @ W_self  +  b
# ----------------------------------------------------------------------------
def _sage_agg_kernel(a_ref, z_ref, xm_ref, ws_ref, b_ref, o_ref, acc_ref, *,
                     apply_relu, tk, resident_z):
    k = pl.program_id(1)

    @pl.when(k == 0)
    def _():
        acc_ref[...] = jnp.zeros_like(acc_ref)

    if resident_z:
        start = pl.multiple_of(k * tk, tk)
        zk = z_ref[pl.ds(start, tk), :]
    else:
        zk = z_ref[...]

    # Mean-neighbor aggregation of projected features (bf16 in, f32 acc on the MXU).
    acc_ref[...] += jnp.dot(a_ref[...], zk, preferred_element_type=jnp.float32)

    @pl.when(k == pl.num_programs(1) - 1)
    def _():
        h = acc_ref[...] + jnp.dot(xm_ref[...], ws_ref[...],
                                   preferred_element_type=jnp.float32)
        h = h + b_ref[...]
        if apply_relu:
            h = jnp.maximum(h, 0.0)
        o_ref[...] = h.astype(o_ref.dtype)


def sage_conv(a, x, w_self, w_neigh, bias, *, apply_relu, out_dtype):
    """One SAGEConv('mean') layer on padded/bf16 operands.

    a      : [N_pad, N_pad]       bf16  row-normalized adjacency
    x      : [N_pad, F_in_pad]    bf16  node features
    w_self : [F_in_pad, F_out_pad] bf16
    w_neigh: [F_in_pad, F_out_pad] bf16
    bias   : [1, F_out_pad]       f32
    """
    n = a.shape[0]
    f_in = x.shape[1]
    f_out = w_self.shape[1]

    tm = _pick_tile(n, want_multi=True)    # keep >=2 row tiles (v7x megacore split)
    tk = _pick_tile(n, want_multi=False)   # contraction tile as large as possible
    tproj = _pick_tile(n, want_multi=True)

    # Pre-project neighbor features: A @ (X W_neigh) == (A @ X) @ W_neigh.
    z = project_neighbors(x, w_neigh, tm=tproj)

    resident_z = 2 * n * f_out * 2 <= _RESIDENT_Z_BYTES
    if resident_z:
        z_spec = pl.BlockSpec((n, f_out), lambda m, k: (0, 0))
        z_vmem = 2 * n * f_out * 2
        z_hbm = n * f_out * 2
    else:
        z_spec = pl.BlockSpec((tk, f_out), lambda m, k: (k, 0))
        z_vmem = 2 * tk * f_out * 2
        z_hbm = (n // tm) * n * f_out * 2   # re-streamed per row tile

    out_isz = jnp.dtype(out_dtype).itemsize
    need = (2 * tm * tk * 2            # A tiles (double-buffered, bf16)
            + z_vmem                   # Z (resident or streamed)
            + 2 * tm * f_in * 2        # X dst-row tiles
            + 2 * f_in * f_out * 2     # W_self (resident)
            + 2 * f_out * 4            # bias
            + 2 * tm * f_out * out_isz  # output tiles
            + tm * f_out * 4)          # f32 accumulator scratch

    flops = 2 * n * n * f_out + 2 * n * f_in * f_out
    bytes_accessed = (n * n * 2 + z_hbm + n * f_in * 2
                      + f_in * f_out * 2 + f_out * 4 + n * f_out * out_isz)

    kern = functools.partial(_sage_agg_kernel, apply_relu=apply_relu, tk=tk,
                             resident_z=resident_z)
    return pl.pallas_call(
        kern,
        out_shape=jax.ShapeDtypeStruct((n, f_out), out_dtype),
        grid_spec=pltpu.PrefetchScalarGridSpec(
            num_scalar_prefetch=0,
            grid=(n // tm, n // tk),
            in_specs=[
                pl.BlockSpec((tm, tk), lambda m, k: (m, k)),          # A tile
                z_spec,                                               # projected neighbors
                pl.BlockSpec((tm, f_in), lambda m, k: (m, 0)),        # X dst rows
                pl.BlockSpec((f_in, f_out), lambda m, k: (0, 0)),     # W_self (resident)
                pl.BlockSpec((1, f_out), lambda m, k: (0, 0)),        # bias (resident)
            ],
            out_specs=pl.BlockSpec((tm, f_out), lambda m, k: (m, 0)),
            scratch_shapes=[pltpu.VMEM((tm, f_out), jnp.float32)],
        ),
        compiler_params=pltpu.CompilerParams(
            dimension_semantics=("parallel", "arbitrary"),
            vmem_limit_bytes=_vmem_limit(need),
        ),
        cost_estimate=pl.CostEstimate(flops=flops, transcendentals=0,
                                      bytes_accessed=bytes_accessed),
    )(a, z, x, w_self, bias)


# ----------------------------------------------------------------------------
# Forward pass
# ----------------------------------------------------------------------------
def prepare_graph(a, *, n_pad):
    """Build the canonical padded, row-normalized, bf16 adjacency ONCE (store this)."""
    n = a.shape[0]
    return jnp.zeros((n_pad, n_pad), jnp.bfloat16).at[:n, :n].set(
        a.astype(jnp.bfloat16))


def _pad_weight(w, f_in_pad, f_out_pad):
    f_in, f_out = w.shape
    return (jnp.zeros((f_in_pad, f_out_pad), jnp.float32)
            .at[:f_in, :f_out].set(w).astype(jnp.bfloat16))


def graphsage_forward(a_p, x, params):
    """Two SAGEConv('mean') layers with ReLU in between.

    a_p : [N_pad, N_pad] bf16 pre-padded, row-normalized adjacency (prepare_graph)
    x   : [N, F_in] f32 node features
    """
    n_pad = a_p.shape[0]
    n, f_in = x.shape
    h_feats = params["w_self1"].shape[1]

    f_in_pad = _round_up(max(f_in, _LANE), _LANE)
    f_h_pad = _round_up(max(h_feats, _LANE), _LANE)

    x_p = jnp.zeros((n_pad, f_in_pad), jnp.bfloat16).at[:n, :f_in].set(
        x.astype(jnp.bfloat16))

    ws1 = _pad_weight(params["w_self1"], f_in_pad, f_h_pad)
    wn1 = _pad_weight(params["w_neigh1"], f_in_pad, f_h_pad)
    b1 = jnp.zeros((1, f_h_pad), jnp.float32).at[:, :h_feats].set(params["b1"])
    ws2 = _pad_weight(params["w_self2"], f_h_pad, f_h_pad)
    wn2 = _pad_weight(params["w_neigh2"], f_h_pad, f_h_pad)
    b2 = jnp.zeros((1, f_h_pad), jnp.float32).at[:, :h_feats].set(params["b2"])

    h = sage_conv(a_p, x_p, ws1, wn1, b1, apply_relu=True,
                  out_dtype=jnp.bfloat16)                 # bf16 intermediate
    h = sage_conv(a_p, h, ws2, wn2, b2, apply_relu=False,
                  out_dtype=jnp.float32)
    return h[:n, :h_feats]


def _reference_forward(a, x, params):
    """Pure-JAX reference for correctness checking."""
    h = x @ params["w_self1"] + (a @ x) @ params["w_neigh1"] + params["b1"]
    h = jnp.maximum(h, 0.0)
    h = h @ params["w_self2"] + (a @ h) @ params["w_neigh2"] + params["b2"]
    return h


def _init_params(key, in_feats, h_feats):
    ks = jax.random.split(key, 6)
    s1 = 1.0 / jnp.sqrt(in_feats)
    s2 = 1.0 / jnp.sqrt(h_feats)
    return {
        "w_self1": jax.random.normal(ks[0], (in_feats, h_feats), jnp.float32) * s1,
        "w_neigh1": jax.random.normal(ks[1], (in_feats, h_feats), jnp.float32) * s1,
        "b1": jax.random.normal(ks[2], (1, h_feats), jnp.float32) * 0.01,
        "w_self2": jax.random.normal(ks[3], (h_feats, h_feats), jnp.float32) * s2,
        "w_neigh2": jax.random.normal(ks[4], (h_feats, h_feats), jnp.float32) * s2,
        "b2": jax.random.normal(ks[5], (1, h_feats), jnp.float32) * 0.01,
    }


if __name__ == "__main__":
    N = 256          # exercises a 2x1 grid (tm=128 x tk=256) with resident Z
    IN_FEATS = 32
    H_FEATS = 32

    key = jax.random.PRNGKey(0)
    k_feat, k_adj, k_param = jax.random.split(key, 3)

    # node features [N, in_feats]
    x = jax.random.normal(k_feat, (N, IN_FEATS), jnp.float32)

    # random directed graph -> dense adjacency, row-normalized by in-degree
    # (isolated nodes -> zero row, matching DGL's mean reducer which yields 0 there)
    adj = (jax.random.uniform(k_adj, (N, N)) < 0.1).astype(jnp.float32)
    indeg = adj.sum(axis=1, keepdims=True)
    a = jnp.where(indeg > 0, adj / jnp.maximum(indeg, 1.0), 0.0)

    params = _init_params(k_param, IN_FEATS, H_FEATS)

    # Canonical padded bf16 adjacency, built once and reused across forwards.
    n_pad = _round_up(max(N, _LANE), _LANE)
    a_p = jax.block_until_ready(prepare_graph(a, n_pad=n_pad))

    fwd = jax.jit(graphsage_forward)
    out = jax.block_until_ready(fwd(a_p, x, params))

    # Reference on bf16-quantized operands (the kernel feeds the MXU bf16, accumulates f32).
    q = lambda t: t.astype(jnp.bfloat16).astype(jnp.float32)
    params_q = {k: (q(v) if k.startswith("w") else v) for k, v in params.items()}
    ref = _reference_forward(q(a), q(x), params_q)

    assert out.shape == (N, H_FEATS)
    assert jnp.allclose(out, ref, atol=3e-2, rtol=3e-2), "mismatch vs pure-JAX reference"

    print("KERNEL_OK")
</pallas_src>

<mosaic_0001>
module attributes {stable_mosaic.version = 11 : i64} {
  func.func @_sage_agg_kernel(%arg0: i32, %arg1: i32, %arg2: memref<128x256xbf16, #tpu.memory_space<vmem>>, %arg3: memref<256x128xbf16, #tpu.memory_space<vmem>>, %arg4: memref<128x128xbf16, #tpu.memory_space<vmem>>, %arg5: memref<128x128xbf16, #tpu.memory_space<vmem>>, %arg6: memref<1x128xf32, #tpu.memory_space<vmem>>, %arg7: memref<128x128xf32, #tpu.memory_space<vmem>>, %arg8: memref<128x128xf32, #tpu.memory_space<vmem>>) attributes {dimension_semantics = [#tpu.dimension_semantics<parallel>, #tpu.dimension_semantics<arbitrary>], iteration_bounds = array<i64: 2, 1>, scalar_prefetch = 0 : i64, scratch_operands = 1 : i64, tpu.core_type = #tpu.core_type<tc>, window_params = [{transform_indices = @transform_0, window_bounds = array<i64: 128, 256>}, {pipeline_mode = #tpu.pipeline_mode<synchronous>, transform_indices = @transform_1, window_bounds = array<i64: 256, 128>}, {transform_indices = @transform_2, window_bounds = array<i64: 128, 128>}, {pipeline_mode = #tpu.pipeline_mode<synchronous>, transform_indices = @transform_3, window_bounds = array<i64: 128, 128>}, {pipeline_mode = #tpu.pipeline_mode<synchronous>, transform_indices = @transform_4, window_bounds = array<i64: 1, 128>}, {transform_indices = @transform_5, window_bounds = array<i64: 128, 128>}]} {
    %c0_i32 = arith.constant 0 : i32
    %0 = arith.cmpi eq, %arg1, %c0_i32 : i32
    %1 = arith.extui %0 : i1 to i32
    %c0_i32_0 = arith.constant 0 : i32
    %2 = arith.cmpi ne, %1, %c0_i32_0 : i32
    scf.if %2 {
      %cst_9 = arith.constant 0.000000e+00 : f32
      %15 = vector.broadcast %cst_9 : f32 to vector<128x128xf32>
      %c0_10 = arith.constant 0 : index
      %c0_11 = arith.constant 0 : index
      %16 = vector.load %arg8[%c0_10, %c0_11] : memref<128x128xf32, #tpu.memory_space<vmem>>, vector<128x128xf32>
      tpu.vector_store %arg8[%c0_10, %c0_11], %15 {strides = array<i32>} : memref<128x128xf32, #tpu.memory_space<vmem>>, vector<128x128xf32>,
    } else {
    }
    %c256_i32 = arith.constant 256 : i32
    %3 = arith.muli %arg1, %c256_i32 : i32
    %4 = tpu.assume_multiple %3, 256 : i32
    %5 = arith.index_cast %4 : i32 to index
    %c0 = arith.constant 0 : index
    %6 = vector.load %arg3[%5, %c0] : memref<256x128xbf16, #tpu.memory_space<vmem>>, vector<256x128xbf16>
    %c0_1 = arith.constant 0 : index
    %c0_2 = arith.constant 0 : index
    %7 = vector.load %arg8[%c0_1, %c0_2] : memref<128x128xf32, #tpu.memory_space<vmem>>, vector<128x128xf32>
    %c0_3 = arith.constant 0 : index
    %c0_4 = arith.constant 0 : index
    %8 = vector.load %arg2[%c0_3, %c0_4] : memref<128x256xbf16, #tpu.memory_space<vmem>>, vector<128x256xbf16>
    %cst = arith.constant dense<0.000000e+00> : vector<128x128xf32>
    %9 = tpu.matmul %8, %6, %cst {dimension_numbers = #tpu.dot_dimension_numbers<[1], [0], [0], [1], [0, 0, 1, 1], [], []>} : vector<128x256xbf16>, vector<256x128xbf16>, vector<128x128xf32> -> vector<128x128xf32>
    %10 = arith.addf %7, %9 : vector<128x128xf32>
    %c0_5 = arith.constant 0 : index
    %c0_6 = arith.constant 0 : index
    %11 = vector.load %arg8[%c0_5, %c0_6] : memref<128x128xf32, #tpu.memory_space<vmem>>, vector<128x128xf32>
    tpu.vector_store %arg8[%c0_5, %c0_6], %10 {strides = array<i32>} : memref<128x128xf32, #tpu.memory_space<vmem>>, vector<128x128xf32>,
    %c0_i32_7 = arith.constant 0 : i32
    %12 = arith.cmpi eq, %arg1, %c0_i32_7 : i32
    %13 = arith.extui %12 : i1 to i32
    %c0_i32_8 = arith.constant 0 : i32
    %14 = arith.cmpi ne, %13, %c0_i32_8 : i32
    scf.if %14 {
      %c0_9 = arith.constant 0 : index
      %c0_10 = arith.constant 0 : index
      %15 = vector.load %arg8[%c0_9, %c0_10] : memref<128x128xf32, #tpu.memory_space<vmem>>, vector<128x128xf32>
      %c0_11 = arith.constant 0 : index
      %c0_12 = arith.constant 0 : index
      %16 = vector.load %arg4[%c0_11, %c0_12] : memref<128x128xbf16, #tpu.memory_space<vmem>>, vector<128x128xbf16>
      %c0_13 = arith.constant 0 : index
      %c0_14 = arith.constant 0 : index
      %17 = vector.load %arg5[%c0_13, %c0_14] : memref<128x128xbf16, #tpu.memory_space<vmem>>, vector<128x128xbf16>
      %cst_15 = arith.constant dense<0.000000e+00> : vector<128x128xf32>
      %18 = tpu.matmul %16, %17, %cst_15 {dimension_numbers = #tpu.dot_dimension_numbers<[1], [0], [0], [1], [0, 0, 1, 1], [], []>} : vector<128x128xbf16>, vector<128x128xbf16>, vector<128x128xf32> -> vector<128x128xf32>
      %19 = arith.addf %15, %18 : vector<128x128xf32>
      %c0_16 = arith.constant 0 : index
      %c0_17 = arith.constant 0 : index
      %20 = vector.load %arg6[%c0_16, %c0_17] : memref<1x128xf32, #tpu.memory_space<vmem>>, vector<1x128xf32>
      %21 = vector.broadcast %20 : vector<1x128xf32> to vector<128x128xf32>
      %22 = arith.addf %19, %21 : vector<128x128xf32>
      %c0_18 = arith.constant 0 : index
      %c0_19 = arith.constant 0 : index
      %23 = vector.load %arg7[%c0_18, %c0_19] : memref<128x128xf32, #tpu.memory_space<vmem>>, vector<128x128xf32>
      tpu.vector_store %arg7[%c0_18, %c0_19], %22 {strides = array<i32>} : memref<128x128xf32, #tpu.memory_space<vmem>>, vector<128x128xf32>,
    } else {
    }
    return
  }
  func.func @transform_0(%arg0: i32, %arg1: i32) -> (i32, i32) {
    %c0_i32 = arith.constant 0 : i32
    return %arg0, %arg1 : i32, i32
  }
  func.func @transform_1(%arg0: i32, %arg1: i32) -> (i32, i32) {
    %c0_i32 = arith.constant 0 : i32
    %c0_i32_0 = arith.constant 0 : i32
    %c0_i32_1 = arith.constant 0 : i32
    return %c0_i32, %c0_i32_0 : i32, i32
  }
  func.func @transform_2(%arg0: i32, %arg1: i32) -> (i32, i32) {
    %c0_i32 = arith.constant 0 : i32
    %c0_i32_0 = arith.constant 0 : i32
    return %arg0, %c0_i32 : i32, i32
  }
  func.func @transform_3(%arg0: i32, %arg1: i32) -> (i32, i32) {
    %c0_i32 = arith.constant 0 : i32
    %c0_i32_0 = arith.constant 0 : i32
    %c0_i32_1 = arith.constant 0 : i32
    return %c0_i32, %c0_i32_0 : i32, i32
  }
  func.func @transform_4(%arg0: i32, %arg1: i32) -> (i32, i32) {
    %c0_i32 = arith.constant 0 : i32
    %c0_i32_0 = arith.constant 0 : i32
    %c0_i32_1 = arith.constant 0 : i32
    return %c0_i32, %c0_i32_0 : i32, i32
  }
  func.func @transform_5(%arg0: i32, %arg1: i32) -> (i32, i32) {
    %c0_i32 = arith.constant 0 : i32
    %c0_i32_0 = arith.constant 0 : i32
    return %arg0, %c0_i32 : i32, i32
  }
}

module attributes {stable_mosaic.version = 11 : i64} {
  func.func @_project_kernel(%arg0: i32, %arg1: memref<128x128xbf16, #tpu.memory_space<vmem>>, %arg2: memref<128x128xbf16, #tpu.memory_space<vmem>>, %arg3: memref<128x128xbf16, #tpu.memory_space<vmem>>) attributes {dimension_semantics = [#tpu.dimension_semantics<parallel>], iteration_bounds = array<i64: 2>, scalar_prefetch = 0 : i64, scratch_operands = 0 : i64, tpu.core_type = #tpu.core_type<tc>, window_params = [{transform_indices = @transform_0, window_bounds = array<i64: 128, 128>}, {pipeline_mode = #tpu.pipeline_mode<synchronous>, transform_indices = @transform_1, window_bounds = array<i64: 128, 128>}, {transform_indices = @transform_2, window_bounds = array<i64: 128, 128>}]} {
    %c0 = arith.constant 0 : index
    %c0_0 = arith.constant 0 : index
    %0 = vector.load %arg1[%c0, %c0_0] : memref<128x128xbf16, #tpu.memory_space<vmem>>, vector<128x128xbf16>
    %c0_1 = arith.constant 0 : index
    %c0_2 = arith.constant 0 : index
    %1 = vector.load %arg2[%c0_1, %c0_2] : memref<128x128xbf16, #tpu.memory_space<vmem>>, vector<128x128xbf16>
    %cst = arith.constant dense<0.000000e+00> : vector<128x128xf32>
    %2 = tpu.matmul %0, %1, %cst {dimension_numbers = #tpu.dot_dimension_numbers<[1], [0], [0], [1], [0, 0, 1, 1], [], []>} : vector<128x128xbf16>, vector<128x128xbf16>, vector<128x128xf32> -> vector<128x128xf32>
    %3 = arith.truncf %2 : vector<128x128xf32> to vector<128x128xbf16>
    %c0_3 = arith.constant 0 : index
    %c0_4 = arith.constant 0 : index
    %4 = vector.load %arg3[%c0_3, %c0_4] : memref<128x128xbf16, #tpu.memory_space<vmem>>, vector<128x128xbf16>
    tpu.vector_store %arg3[%c0_3, %c0_4], %3 {strides = array<i32>} : memref<128x128xbf16, #tpu.memory_space<vmem>>, vector<128x128xbf16>,
    return
  }
  func.func @transform_0(%arg0: i32) -> (i32, i32) {
    %c0_i32 = arith.constant 0 : i32
    %c0_i32_0 = arith.constant 0 : i32
    return %arg0, %c0_i32 : i32, i32
  }
  func.func @transform_1(%arg0: i32) -> (i32, i32) {
    %c0_i32 = arith.constant 0 : i32
    %c0_i32_0 = arith.constant 0 : i32
    %c0_i32_1 = arith.constant 0 : i32
    return %c0_i32, %c0_i32_0 : i32, i32
  }
  func.func @transform_2(%arg0: i32) -> (i32, i32) {
    %c0_i32 = arith.constant 0 : i32
    %c0_i32_0 = arith.constant 0 : i32
    return %arg0, %c0_i32 : i32, i32
  }
}

module attributes {stable_mosaic.version = 11 : i64} {
  func.func @_sage_agg_kernel(%arg0: i32, %arg1: i32, %arg2: memref<128x256xbf16, #tpu.memory_space<vmem>>, %arg3: memref<256x128xbf16, #tpu.memory_space<vmem>>, %arg4: memref<128x128xbf16, #tpu.memory_space<vmem>>, %arg5: memref<128x128xbf16, #tpu.memory_space<vmem>>, %arg6: memref<1x128xf32, #tpu.memory_space<vmem>>, %arg7: memref<128x128xbf16, #tpu.memory_space<vmem>>, %arg8: memref<128x128xf32, #tpu.memory_space<vmem>>) attributes {dimension_semantics = [#tpu.dimension_semantics<parallel>, #tpu.dimension_semantics<arbitrary>], iteration_bounds = array<i64: 2, 1>, scalar_prefetch = 0 : i64, scratch_operands = 1 : i64, tpu.core_type = #tpu.core_type<tc>, window_params = [{transform_indices = @transform_0, window_bounds = array<i64: 128, 256>}, {pipeline_mode = #tpu.pipeline_mode<synchronous>, transform_indices = @transform_1, window_bounds = array<i64: 256, 128>}, {transform_indices = @transform_2, window_bounds = array<i64: 128, 128>}, {pipeline_mode = #tpu.pipeline_mode<synchronous>, transform_indices = @transform_3, window_bounds = array<i64: 128, 128>}, {pipeline_mode = #tpu.pipeline_mode<synchronous>, transform_indices = @transform_4, window_bounds = array<i64: 1, 128>}, {transform_indices = @transform_5, window_bounds = array<i64: 128, 128>}]} {
    %c0_i32 = arith.constant 0 : i32
    %0 = arith.cmpi eq, %arg1, %c0_i32 : i32
    %1 = arith.extui %0 : i1 to i32
    %c0_i32_0 = arith.constant 0 : i32
    %2 = arith.cmpi ne, %1, %c0_i32_0 : i32
    scf.if %2 {
      %cst_9 = arith.constant 0.000000e+00 : f32
      %15 = vector.broadcast %cst_9 : f32 to vector<128x128xf32>
      %c0_10 = arith.constant 0 : index
      %c0_11 = arith.constant 0 : index
      %16 = vector.load %arg8[%c0_10, %c0_11] : memref<128x128xf32, #tpu.memory_space<vmem>>, vector<128x128xf32>
      tpu.vector_store %arg8[%c0_10, %c0_11], %15 {strides = array<i32>} : memref<128x128xf32, #tpu.memory_space<vmem>>, vector<128x128xf32>,
    } else {
    }
    %c256_i32 = arith.constant 256 : i32
    %3 = arith.muli %arg1, %c256_i32 : i32
    %4 = tpu.assume_multiple %3, 256 : i32
    %5 = arith.index_cast %4 : i32 to index
    %c0 = arith.constant 0 : index
    %6 = vector.load %arg3[%5, %c0] : memref<256x128xbf16, #tpu.memory_space<vmem>>, vector<256x128xbf16>
    %c0_1 = arith.constant 0 : index
    %c0_2 = arith.constant 0 : index
    %7 = vector.load %arg8[%c0_1, %c0_2] : memref<128x128xf32, #tpu.memory_space<vmem>>, vector<128x128xf32>
    %c0_3 = arith.constant 0 : index
    %c0_4 = arith.constant 0 : index
    %8 = vector.load %arg2[%c0_3, %c0_4] : memref<128x256xbf16, #tpu.memory_space<vmem>>, vector<128x256xbf16>
    %cst = arith.constant dense<0.000000e+00> : vector<128x128xf32>
    %9 = tpu.matmul %8, %6, %cst {dimension_numbers = #tpu.dot_dimension_numbers<[1], [0], [0], [1], [0, 0, 1, 1], [], []>} : vector<128x256xbf16>, vector<256x128xbf16>, vector<128x128xf32> -> vector<128x128xf32>
    %10 = arith.addf %7, %9 : vector<128x128xf32>
    %c0_5 = arith.constant 0 : index
    %c0_6 = arith.constant 0 : index
    %11 = vector.load %arg8[%c0_5, %c0_6] : memref<128x128xf32, #tpu.memory_space<vmem>>, vector<128x128xf32>
    tpu.vector_store %arg8[%c0_5, %c0_6], %10 {strides = array<i32>} : memref<128x128xf32, #tpu.memory_space<vmem>>, vector<128x128xf32>,
    %c0_i32_7 = arith.constant 0 : i32
    %12 = arith.cmpi eq, %arg1, %c0_i32_7 : i32
    %13 = arith.extui %12 : i1 to i32
    %c0_i32_8 = arith.constant 0 : i32
    %14 = arith.cmpi ne, %13, %c0_i32_8 : i32
    scf.if %14 {
      %c0_9 = arith.constant 0 : index
      %c0_10 = arith.constant 0 : index
      %15 = vector.load %arg8[%c0_9, %c0_10] : memref<128x128xf32, #tpu.memory_space<vmem>>, vector<128x128xf32>
      %c0_11 = arith.constant 0 : index
      %c0_12 = arith.constant 0 : index
      %16 = vector.load %arg4[%c0_11, %c0_12] : memref<128x128xbf16, #tpu.memory_space<vmem>>, vector<128x128xbf16>
      %c0_13 = arith.constant 0 : index
      %c0_14 = arith.constant 0 : index
      %17 = vector.load %arg5[%c0_13, %c0_14] : memref<128x128xbf16, #tpu.memory_space<vmem>>, vector<128x128xbf16>
      %cst_15 = arith.constant dense<0.000000e+00> : vector<128x128xf32>
      %18 = tpu.matmul %16, %17, %cst_15 {dimension_numbers = #tpu.dot_dimension_numbers<[1], [0], [0], [1], [0, 0, 1, 1], [], []>} : vector<128x128xbf16>, vector<128x128xbf16>, vector<128x128xf32> -> vector<128x128xf32>
      %19 = arith.addf %15, %18 : vector<128x128xf32>
      %c0_16 = arith.constant 0 : index
      %c0_17 = arith.constant 0 : index
      %20 = vector.load %arg6[%c0_16, %c0_17] : memref<1x128xf32, #tpu.memory_space<vmem>>, vector<1x128xf32>
      %21 = vector.broadcast %20 : vector<1x128xf32> to vector<128x128xf32>
      %22 = arith.addf %19, %21 : vector<128x128xf32>
      %cst_18 = arith.constant 0.000000e+00 : f32
      %23 = vector.broadcast %cst_18 : f32 to vector<128x128xf32>
      %24 = arith.maximumf %22, %23 : vector<128x128xf32>
      %25 = arith.truncf %24 : vector<128x128xf32> to vector<128x128xbf16>
      %c0_19 = arith.constant 0 : index
      %c0_20 = arith.constant 0 : index
      %26 = vector.load %arg7[%c0_19, %c0_20] : memref<128x128xbf16, #tpu.memory_space<vmem>>, vector<128x128xbf16>
      tpu.vector_store %arg7[%c0_19, %c0_20], %25 {strides = array<i32>} : memref<128x128xbf16, #tpu.memory_space<vmem>>, vector<128x128xbf16>,
    } else {
    }
    return
  }
  func.func @transform_0(%arg0: i32, %arg1: i32) -> (i32, i32) {
    %c0_i32 = arith.constant 0 : i32
    return %arg0, %arg1 : i32, i32
  }
  func.func @transform_1(%arg0: i32, %arg1: i32) -> (i32, i32) {
    %c0_i32 = arith.constant 0 : i32
    %c0_i32_0 = arith.constant 0 : i32
    %c0_i32_1 = arith.constant 0 : i32
    return %c0_i32, %c0_i32_0 : i32, i32
  }
  func.func @transform_2(%arg0: i32, %arg1: i32) -> (i32, i32) {
    %c0_i32 = arith.constant 0 : i32
    %c0_i32_0 = arith.constant 0 : i32
    return %arg0, %c0_i32 : i32, i32
  }
  func.func @transform_3(%arg0: i32, %arg1: i32) -> (i32, i32) {
    %c0_i32 = arith.constant 0 : i32
    %c0_i32_0 = arith.constant 0 : i32
    %c0_i32_1 = arith.constant 0 : i32
    return %c0_i32, %c0_i32_0 : i32, i32
  }
  func.func @transform_4(%arg0: i32, %arg1: i32) -> (i32, i32) {
    %c0_i32 = arith.constant 0 : i32
    %c0_i32_0 = arith.constant 0 : i32
    %c0_i32_1 = arith.constant 0 : i32
    return %c0_i32, %c0_i32_0 : i32, i32
  }
  func.func @transform_5(%arg0: i32, %arg1: i32) -> (i32, i32) {
    %c0_i32 = arith.constant 0 : i32
    %c0_i32_0 = arith.constant 0 : i32
    return %arg0, %c0_i32 : i32, i32
  }
}

</mosaic_0001>

<llo_original>
// kernel: graphsage_forward.4
$region0: #{graphsage_forward.4}
  #allocation0 [shape = 'u32[]', space=smem, size = 0x4, offset = 0x4, fixed_abs, tag = 'smem constant byte address 0x4 - core index']
  #allocation1 [shape = 'u32[72,128]{1,0:T(1,128)}', space=vmem, size = 0x9000, scoped, tag = 'internal scratch']
  %s0 = inlined_call_operand.vmem [shape: bf16[256,128], index: 0, kind: input, shape index: {}]
  %s1 = inlined_call_operand.vmem [shape: bf16[128,128], index: 1, kind: input, shape index: {}]
  %s2 = inlined_call_operand.vmem [shape: bf16[256,128], index: 2, kind: output, shape index: {}]
  %s3 = sld [smem:[#allocation0]]
  $region41: #{graphsage_forward.4} parent=0
    _
  %s5 = ssub.s32 1, %s3
  %s6 = scalar_select 0, %s5, %s3
  loop: start=0, step=1, limit=4
  $region2: #{graphsage_forward.4} parent=0 // loop_pre_header
    _
  $region3: #{graphsage_forward.4} parent=0 // loop_header
    %s8 = sphi 0, %s12
    %p9 = scmp.ge.s32.totalorder %s8, 4
    %s18 = sphi 0, %s20
    %s21 = sphi 0, %s18
    %s22 = sphi 0, %s21
    %s38 = sphi 0, %s22
    %s42 = sphi 0, %s42
    %s44 = sphi 0, %s42
    %s45 = sphi 0, %s44
    %s59 = sphi 0, %s45
    %s65 = sphi 0, %s67
    %s68 = sphi 0, %s65
    %s69 = sphi 0, %s68
    %s85 = sphi 0, %s69
  $region4: #{graphsage_forward.4} parent=0 // loop_header_branch
    %11 = sbr.rel (%p9) target = $region8
  $region5: #{graphsage_forward.4} parent=0 // loop_body
    %s13 = ssub.s32 %s8, 1
    %s14 = ssub.s32 %s8, 2
    %s15 = sadd.s32 %s8, 1
    %s16 = ssub.s32 %s8, %s15
    %p17 = scmp.eq.s32.totalorder %s16, 0
    %s19 = sadd.s32 %s18, 1
    %s20 = scalar_select %p17, %s18, %s19
    %p23 = pneg %p17
    %p24 = scmp.eq.s32.totalorder %s8, 1
    %p25 = por %p23, %p24
    %p26 = scmp.ne.s32.totalorder %s18, %s21
    %p27 = scmp.eq.s32.totalorder %s8, 0
    %p28 = por %p26, %p27
    %p29 = scmp.ne.s32.totalorder %s18, %s21
    %p30 = scmp.eq.s32.totalorder %s13, 1
    %p31 = por %p29, %p30
    %p32 = scmp.ne.s32.totalorder %s21, %s22
    %p33 = scmp.eq.s32.totalorder %s13, 0
    %p34 = por %p32, %p33
    %p35 = scmp.ne.s32.totalorder %s21, %s22
    %p36 = scmp.eq.s32.totalorder %s14, 1
    %p37 = por %p35, %p36
    %p39 = scmp.ne.s32.totalorder %s22, %s38
    %p40 = scmp.eq.s32.totalorder %s14, 0
    %p41 = por %p39, %p40
    %s43 = sadd.s32 %s42, 1
    %p46 = scmp.eq.s32.totalorder %s8, 1
    %p47 = scmp.ne.s32.totalorder %s42, %s44
    %p48 = scmp.eq.s32.totalorder %s8, 0
    %p49 = por %p47, %p48
    %p50 = scmp.ne.s32.totalorder %s42, %s44
    %p51 = scmp.eq.s32.totalorder %s13, 1
    %p52 = por %p50, %p51
    %p53 = scmp.ne.s32.totalorder %s44, %s45
    %p54 = scmp.eq.s32.totalorder %s13, 0
    %p55 = por %p53, %p54
    %p56 = scmp.ne.s32.totalorder %s44, %s45
    %p57 = scmp.eq.s32.totalorder %s14, 1
    %p58 = por %p56, %p57
    %p60 = scmp.ne.s32.totalorder %s45, %s59
    %p61 = scmp.eq.s32.totalorder %s14, 0
    %p62 = por %p60, %p61
    %s63 = ssub.s32 %s8, %s15
    %p64 = scmp.eq.s32.totalorder %s63, 0
    %s66 = sadd.s32 %s65, 1
    %s67 = scalar_select %p64, %s65, %s66
    %p70 = pneg %p64
    %p71 = scmp.eq.s32.totalorder %s8, 1
    %p72 = por %p70, %p71
    %p73 = scmp.ne.s32.totalorder %s65, %s68
    %p74 = scmp.eq.s32.totalorder %s8, 0
    %p75 = por %p73, %p74
    %p76 = scmp.ne.s32.totalorder %s65, %s68
    %p77 = scmp.eq.s32.totalorder %s13, 1
    %p78 = por %p76, %p77
    %p79 = scmp.ne.s32.totalorder %s68, %s69
    %p80 = scmp.eq.s32.totalorder %s13, 0
    %p81 = por %p79, %p80
    %p82 = scmp.ne.s32.totalorder %s68, %s69
    %p83 = scmp.eq.s32.totalorder %s14, 1
    %p84 = por %p82, %p83
    %p86 = scmp.ne.s32.totalorder %s69, %s85
    %p87 = scmp.eq.s32.totalorder %s14, 0
    %p88 = por %p86, %p87
    %p89 = scmp.le.s32.totalorder 1, %s8
    %p90 = scmp.lt.s32.totalorder %s8, 3
    %p91 = pnand %p89, %p90
    %p92 = pneg %p91
    // Predicated region
    $region9: #{graphsage_forward.4} parent=5 // pred_check
      _
    $region10: #{graphsage_forward.4} parent=5 // pred_check_branch
      %94 = sbr.rel (%p91) target = $region12
    $region11: #{graphsage_forward.4} parent=5 // pred_region
      %s95 = ssub.s32 %s8, 1
      // Predicated region
      $region13: #{graphsage_forward.4} parent=11 // pred_check
        %p96 = pneg %p55
      $region14: #{graphsage_forward.4} parent=11 // pred_check_branch
        %98 = sbr.rel (%p96) target = $region16
      $region15: #{graphsage_forward.4} parent=11 // pred_region
        _
      $region16: #{graphsage_forward.4} parent=11 // pred_fallthru
        _
    $region12: #{graphsage_forward.4} parent=5 // pred_fallthru
      _
    %p99 = scmp.lt.s32.totalorder %s8, 2
    // Predicated region
    $region17: #{graphsage_forward.4} parent=5 // pred_check
      %p100 = pneg %p99
    $region18: #{graphsage_forward.4} parent=5 // pred_check_branch
      %102 = sbr.rel (%p100) target = $region20
    $region19: #{graphsage_forward.4} parent=5 // pred_region
      // Predicated region
      $region21: #{graphsage_forward.4} parent=19 // pred_check
        %p103 = pneg %p28
      $region22: #{graphsage_forward.4} parent=19 // pred_check_branch
        %105 = sbr.rel (%p103) target = $region24
      $region23: #{graphsage_forward.4} parent=19 // pred_region
        %s106 = smul.u32 16, %s8
        %p107 = scmp.lt.s32.totalorder %s106, 31
        %s108 = scalar_select %p107, %s106, 31
        %s109 = smul.addr %s108, 4
        %s110 = scalar_lea.vmem %s0, %s109
        %s111 = smul.u32 16, %s8
      $region24: #{graphsage_forward.4} parent=19 // pred_fallthru
        _
    $region20: #{graphsage_forward.4} parent=5 // pred_fallthru
      _
    %p112 = scmp.le.s32.totalorder 1, %s8
    %p113 = scmp.lt.s32.totalorder %s8, 3
    %p114 = pnand %p112, %p113
    %p115 = pneg %p114
    // Predicated region
    $region25: #{graphsage_forward.4} parent=5 // pred_check
      _
    $region26: #{graphsage_forward.4} parent=5 // pred_check_branch
      %117 = sbr.rel (%p114) target = $region28
    $region27: #{graphsage_forward.4} parent=5 // pred_region
      %s118 = ssub.s32 %s8, 1
      %s119 = smul.u32 16, %s13
      %p120 = scmp.lt.s32.totalorder %s119, 31
      %s121 = scalar_select %p120, %s119, 31
      %s122 = smul.addr %s121, 4
      %s123 = scalar_lea.vmem %s0, %s122
      %p124 = pneg %p34
      %p125 = pneg %p31
      %p126 = pneg %p55
      %p127 = pneg %p52
      %p128 = pneg %p81
      %p129 = pneg %p78
      %s130 = smul.u32 16, %s13
      %p131 = scmp.lt.s32.totalorder %s130, 31
      %s132 = scalar_select %p131, %s130, 31
      %s133 = smul.addr %s132, 4
      %s134 = scalar_lea.vmem %s2, %s133
      %s135 = smul.u32 16, %s13
      %p136 = scmp.lt.s32.totalorder %s135, 31
      %s137 = scalar_select %p136, %s135, 31
      %s138 = smul.addr %s137, 4
      %s139 = scalar_lea.vmem %s0, %s138
      %s140 = smul.u32 16, %s13
      %s141 = smul.u32 16, %s13
      %p142 = scmp.lt.s32.totalorder %s141, 31
      %s143 = scalar_select %p142, %s141, 31
      %s144 = smul.addr %s143, 4
      %s145 = scalar_lea.vmem %s2, %s144
      %s146 = smul.u32 16, %s13
      %v147 = vld [vmem:[%s139] sm:$0xf]
      %v148 = vld [vmem:[%s139 + $0x4] sm:$0xf]
      %v149 = vld [vmem:[%s139 + $0x8] sm:$0xf]
      %v150 = vld [vmem:[%s139 + $0xc] sm:$0xf]
      %v151 = vld [vmem:[%s139 + $0x10] sm:$0xf]
      %v152 = vld [vmem:[%s139 + $0x14] sm:$0xf]
      %v153 = vld [vmem:[%s139 + $0x18] sm:$0xf]
      %v154 = vld [vmem:[%s139 + $0x1c] sm:$0xf]
      %v155 = vld [vmem:[%s139 + $0x20] sm:$0xf]
      %v156 = vld [vmem:[%s139 + $0x24] sm:$0xf]
      %v157 = vld [vmem:[%s139 + $0x28] sm:$0xf]
      %v158 = vld [vmem:[%s139 + $0x2c] sm:$0xf]
      %v159 = vld [vmem:[%s139 + $0x30] sm:$0xf]
      %v160 = vld [vmem:[%s139 + $0x34] sm:$0xf]
      %v161 = vld [vmem:[%s139 + $0x38] sm:$0xf]
      %v162 = vld [vmem:[%s139 + $0x3c] sm:$0xf]
      %v163 = vld [vmem:[%s1] sm:$0xf]
      %v164 = vld [vmem:[%s1 + $0x4] sm:$0xf]
      %v165 = vld [vmem:[%s1 + $0x8] sm:$0xf]
      %v166 = vld [vmem:[%s1 + $0xc] sm:$0xf]
      %v167 = vld [vmem:[%s1 + $0x10] sm:$0xf]
      %v168 = vld [vmem:[%s1 + $0x14] sm:$0xf]
      %v169 = vld [vmem:[%s1 + $0x18] sm:$0xf]
      %v170 = vld [vmem:[%s1 + $0x1c] sm:$0xf]
      %v171 = vld [vmem:[%s1 + $0x20] sm:$0xf]
      %v172 = vld [vmem:[%s1 + $0x24] sm:$0xf]
      %v173 = vld [vmem:[%s1 + $0x28] sm:$0xf]
      %v174 = vld [vmem:[%s1 + $0x2c] sm:$0xf]
      %v175 = vld [vmem:[%s1 + $0x30] sm:$0xf]
      %v176 = vld [vmem:[%s1 + $0x34] sm:$0xf]
      %v177 = vld [vmem:[%s1 + $0x38] sm:$0xf]
      %v178 = vld [vmem:[%s1 + $0x3c] sm:$0xf]
      %v195 = vunpack.c.l.b16 %v147
      %v196 = vunpack.c.l.b16 %v148
      %v197 = vunpack.c.l.b16 %v149
      %v198 = vunpack.c.l.b16 %v150
      %v199 = vunpack.c.l.b16 %v151
      %v200 = vunpack.c.l.b16 %v152
      %v201 = vunpack.c.l.b16 %v153
      %v202 = vunpack.c.l.b16 %v154
      %v203 = vunpack.c.l.b16 %v155
      %v204 = vunpack.c.l.b16 %v156
      %v205 = vunpack.c.l.b16 %v157
      %v206 = vunpack.c.l.b16 %v158
      %v207 = vunpack.c.l.b16 %v159
      %v208 = vunpack.c.l.b16 %v160
      %v209 = vunpack.c.l.b16 %v161
      %v210 = vunpack.c.l.b16 %v162
      %v211 = vpack.c.b16 %v196, %v195
      %v212 = vpack.c.b16 %v198, %v197
      %v213 = vpack.c.b16 %v200, %v199
      %v214 = vpack.c.b16 %v202, %v201
      %v215 = vpack.c.b16 %v204, %v203
      %v216 = vpack.c.b16 %v206, %v205
      %v217 = vpack.c.b16 %v208, %v207
      %v218 = vpack.c.b16 %v210, %v209
      %v243 = vunpack.c.l.b16 %v163
      %v244 = vunpack.c.l.b16 %v164
      %v245 = vunpack.c.l.b16 %v165
      %v246 = vunpack.c.l.b16 %v166
      %v247 = vunpack.c.l.b16 %v167
      %v248 = vunpack.c.l.b16 %v168
      %v249 = vunpack.c.l.b16 %v169
      %v250 = vunpack.c.l.b16 %v170
      %v251 = vunpack.c.l.b16 %v171
      %v252 = vunpack.c.l.b16 %v172
      %v253 = vunpack.c.l.b16 %v173
      %v254 = vunpack.c.l.b16 %v174
      %v255 = vunpack.c.l.b16 %v175
      %v256 = vunpack.c.l.b16 %v176
      %v257 = vunpack.c.l.b16 %v177
      %v258 = vunpack.c.l.b16 %v178
      %v259 = vpack.c.b16 %v244, %v243
      %v260 = vpack.c.b16 %v246, %v245
      %v261 = vpack.c.b16 %v248, %v247
      %v262 = vpack.c.b16 %v250, %v249
      %v263 = vpack.c.b16 %v252, %v251
      %v264 = vpack.c.b16 %v254, %v253
      %v265 = vpack.c.b16 %v256, %v255
      %v266 = vpack.c.b16 %v258, %v257
      %275 = vmatpush.bf16.msra.mxu0 %v266
      %276 = vmatpush.bf16.msra.mxu0 %v265
      %277 = vmatpush.bf16.msra.mxu0 %v264
      %278 = vmatpush.bf16.msra.mxu0 %v263
      %279 = vmatpush.bf16.msra.mxu0 %v262
      %280 = vmatpush.bf16.msra.mxu0 %v261
      %281 = vmatpush.bf16.msra.mxu0 %v260
      %282 = vmatpush.bf16.msra.mxu0 %v259
      %283 = vmatmul.bf16.gmra.mxu0 %v211
      %v284 = vpop.f32.mrf.mxu0
      %v285 = vadd.f32 0.0, %v284
      %v286 = vpop.f32.mrf.mxu0
      %v287 = vadd.f32 0.0, %v286
      %288 = vmatmul.bf16.gmra.mxu0 %v212
      %v289 = vpop.f32.mrf.mxu0
      %v290 = vadd.f32 0.0, %v289
      %v291 = vpop.f32.mrf.mxu0
      %v292 = vadd.f32 0.0, %v291
      %293 = vmatmul.bf16.gmra.mxu0 %v213
      %v294 = vpop.f32.mrf.mxu0
      %v295 = vadd.f32 0.0, %v294
      %v296 = vpop.f32.mrf.mxu0
      %v297 = vadd.f32 0.0, %v296
      %298 = vmatmul.bf16.gmra.mxu0 %v214
      %v299 = vpop.f32.mrf.mxu0
      %v300 = vadd.f32 0.0, %v299
      %v301 = vpop.f32.mrf.mxu0
      %v302 = vadd.f32 0.0, %v301
      %303 = vmatmul.bf16.gmra.mxu0 %v215
      %v304 = vpop.f32.mrf.mxu0
      %v305 = vadd.f32 0.0, %v304
      %v306 = vpop.f32.mrf.mxu0
      %v307 = vadd.f32 0.0, %v306
      %308 = vmatmul.bf16.gmra.mxu0 %v216
      %v309 = vpop.f32.mrf.mxu0
      %v310 = vadd.f32 0.0, %v309
      %v311 = vpop.f32.mrf.mxu0
      %v312 = vadd.f32 0.0, %v311
      %313 = vmatmul.bf16.gmra.mxu0 %v217
      %v314 = vpop.f32.mrf.mxu0
      %v315 = vadd.f32 0.0, %v314
      %v316 = vpop.f32.mrf.mxu0
      %v317 = vadd.f32 0.0, %v316
      %318 = vmatmul.bf16.gmra.mxu0 %v218
      %v319 = vpop.f32.mrf.mxu0
      %v320 = vadd.f32 0.0, %v319
      %v321 = vpop.f32.mrf.mxu0
      %v322 = vadd.f32 0.0, %v321
      %323 = vdwg.mxu0
      %v324 = vpack.c.bf16 %v285, %v285
      %v325 = vpack.c.bf16 %v287, %v287
      %v326 = vpack.c.bf16 %v290, %v290
      %v327 = vpack.c.bf16 %v292, %v292
      %v328 = vpack.c.bf16 %v295, %v295
      %v329 = vpack.c.bf16 %v297, %v297
      %v330 = vpack.c.bf16 %v300, %v300
      %v331 = vpack.c.bf16 %v302, %v302
      %v332 = vpack.c.bf16 %v305, %v305
      %v333 = vpack.c.bf16 %v307, %v307
      %v334 = vpack.c.bf16 %v310, %v310
      %v335 = vpack.c.bf16 %v312, %v312
      %v336 = vpack.c.bf16 %v315, %v315
      %v337 = vpack.c.bf16 %v317, %v317
      %v338 = vpack.c.bf16 %v320, %v320
      %v339 = vpack.c.bf16 %v322, %v322
      %340 = vst [vmem:[%s145] sm:$0xf] %v324
      %341 = vst [vmem:[%s145 + $0x4] sm:$0xf] %v325
      %342 = vst [vmem:[%s145 + $0x8] sm:$0xf] %v326
      %343 = vst [vmem:[%s145 + $0xc] sm:$0xf] %v327
      %344 = vst [vmem:[%s145 + $0x10] sm:$0xf] %v328
      %345 = vst [vmem:[%s145 + $0x14] sm:$0xf] %v329
      %346 = vst [vmem:[%s145 + $0x18] sm:$0xf] %v330
      %347 = vst [vmem:[%s145 + $0x1c] sm:$0xf] %v331
      %348 = vst [vmem:[%s145 + $0x20] sm:$0xf] %v332
      %349 = vst [vmem:[%s145 + $0x24] sm:$0xf] %v333
      %350 = vst [vmem:[%s145 + $0x28] sm:$0xf] %v334
      %351 = vst [vmem:[%s145 + $0x2c] sm:$0xf] %v335
      %352 = vst [vmem:[%s145 + $0x30] sm:$0xf] %v336
      %353 = vst [vmem:[%s145 + $0x34] sm:$0xf] %v337
      %354 = vst [vmem:[%s145 + $0x38] sm:$0xf] %v338
      %355 = vst [vmem:[%s145 + $0x3c] sm:$0xf] %v339
      %s356 = smul.u32 16, %s13
      %p357 = scmp.lt.s32.totalorder %s356, 31
      %s358 = scalar_select %p357, %s356, 31
      %s359 = smul.addr %s358, 4
      %s360 = scalar_lea.vmem %s2, %s359
      // Predicated region
      $region29: #{graphsage_forward.4} parent=27 // pred_check
        %p361 = pneg %p78
      $region30: #{graphsage_forward.4} parent=27 // pred_check_branch
        %363 = sbr.rel (%p361) target = $region32
      $region31: #{graphsage_forward.4} parent=27 // pred_region
        %s364 = smul.u32 16, %s13
      $region32: #{graphsage_forward.4} parent=27 // pred_fallthru
        _
    $region28: #{graphsage_forward.4} parent=5 // pred_fallthru
      _
    %p365 = scmp.le.s32.totalorder 2, %s8
    // Predicated region
    $region33: #{graphsage_forward.4} parent=5 // pred_check
      %p366 = pneg %p365
    $region34: #{graphsage_forward.4} parent=5 // pred_check_branch
      %368 = sbr.rel (%p366) target = $region36
    $region35: #{graphsage_forward.4} parent=5 // pred_region
      %s369 = ssub.s32 %s8, 2
      // Predicated region
      $region37: #{graphsage_forward.4} parent=35 // pred_check
        %p370 = pneg %p84
      $region38: #{graphsage_forward.4} parent=35 // pred_check_branch
        %372 = sbr.rel (%p370) target = $region40
      $region39: #{graphsage_forward.4} parent=35 // pred_region
        %s373 = smul.u32 16, %s14
        %p374 = scmp.lt.s32.totalorder %s373, 31
        %s375 = scalar_select %p374, %s373, 31
        %s376 = smul.addr %s375, 4
        %s377 = scalar_lea.vmem %s2, %s376
      $region40: #{graphsage_forward.4} parent=35 // pred_fallthru
        _
    $region36: #{graphsage_forward.4} parent=5 // pred_fallthru
      _
  $region6: #{graphsage_forward.4} parent=0 // loop_footer
    %s12 = sadd.s32 1, %s8
  $region7: #{graphsage_forward.4} parent=0 // loop_footer_branch
    %7 = sbr.rel target = $region3
  $region8: #{graphsage_forward.4} parent=0 // loop_exit
    _

// kernel: graphsage_forward.7
$region0: #{graphsage_forward.7}
  #allocation0 [shape = 'u32[]', space=smem, size = 0x4, offset = 0x4, fixed_abs, tag = 'smem constant byte address 0x4 - core index']
  #allocation1 [shape = 'u32[72,128]{1,0:T(1,128)}', space=vmem, size = 0x9000, scoped, tag = 'internal scratch']
  #allocation2 [shape = 'f32[128,128]{1,0:T(8,128)}', space=vmem, size = 0x10000, scoped, tag = 'scratch operand']
  %s0 = inlined_call_operand.vmem [shape: bf16[256,256], index: 0, kind: input, shape index: {}]
  %s1 = inlined_call_operand.vmem [shape: bf16[256,128], index: 1, kind: input, shape index: {}]
  %s2 = inlined_call_operand.vmem [shape: bf16[256,128], index: 2, kind: input, shape index: {}]
  %s3 = inlined_call_operand.vmem [shape: bf16[128,128], index: 3, kind: input, shape index: {}]
  %s4 = inlined_call_operand.vmem [shape: f32[1,128], index: 4, kind: input, shape index: {}]
  %s5 = inlined_call_operand.vmem [shape: f32[256,128], index: 5, kind: output, shape index: {}]
  %s6 = sld [smem:[#allocation0]]
  $region61: #{graphsage_forward.7} parent=0
    _
  %s8 = ssub.s32 1, %s6
  %s9 = scalar_select 0, %s8, %s6
  loop: start=0, step=1, limit=4
  $region2: #{graphsage_forward.7} parent=0 // loop_pre_header
    _
  $region3: #{graphsage_forward.7} parent=0 // loop_header
    %s11 = sphi 0, %s15
    %p12 = scmp.ge.s32.totalorder %s11, 4
    %s18 = sphi 0, %s30
    %s19 = sphi 0, %s26
    %s20 = sphi 0, %s18
    %s21 = sphi 0, %s19
    %s22 = sphi 0, %s20
    %s23 = sphi 0, %s21
    %s35 = sphi 0, %s37
    %s38 = sphi 0, %s35
    %s39 = sphi 0, %s38
    %s55 = sphi 0, %s39
    %s59 = sphi 0, %s59
    %s61 = sphi 0, %s59
    %s62 = sphi 0, %s61
    %s76 = sphi 0, %s62
    %s82 = sphi 0, %s84
    %s85 = sphi 0, %s82
    %s86 = sphi 0, %s85
    %s102 = sphi 0, %s86
    %s106 = sphi 0, %s106
    %s108 = sphi 0, %s106
    %s109 = sphi 0, %s108
    %s123 = sphi 0, %s109
    %s127 = sphi 0, %s127
    %s129 = sphi 0, %s127
    %s130 = sphi 0, %s129
    %s144 = sphi 0, %s130
    %s150 = sphi 0, %s152
    %s153 = sphi 0, %s150
    %s154 = sphi 0, %s153
    %s170 = sphi 0, %s154
  $region4: #{graphsage_forward.7} parent=0 // loop_header_branch
    %14 = sbr.rel (%p12) target = $region8
  $region5: #{graphsage_forward.7} parent=0 // loop_body
    %s16 = ssub.s32 %s11, 1
    %s17 = ssub.s32 %s11, 2
    %s24 = sadd.s32 1, %s19
    %p25 = scmp.ge.s32.totalorder %s24, 1
    %s26 = scalar_select %p25, 0, %s24
    %s27 = sadd.s32 1, %s18
    %s28 = scalar_select %p25, %s27, %s18
    %p29 = scmp.ge.s32.totalorder %s28, 2
    %s30 = scalar_select %p29, 0, %s28
    %s31 = ssub.s32 %s18, %s30
    %s32 = ssub.s32 %s19, %s26
    %s33 = sor.u32 %s31, %s32
    %p34 = scmp.eq.s32.totalorder %s33, 0
    %s36 = sadd.s32 %s35, 1
    %s37 = scalar_select %p34, %s35, %s36
    %p40 = pneg %p34
    %p41 = scmp.eq.s32.totalorder %s11, 1
    %p42 = por %p40, %p41
    %p43 = scmp.ne.s32.totalorder %s35, %s38
    %p44 = scmp.eq.s32.totalorder %s11, 0
    %p45 = por %p43, %p44
    %p46 = scmp.ne.s32.totalorder %s35, %s38
    %p47 = scmp.eq.s32.totalorder %s16, 1
    %p48 = por %p46, %p47
    %p49 = scmp.ne.s32.totalorder %s38, %s39
    %p50 = scmp.eq.s32.totalorder %s16, 0
    %p51 = por %p49, %p50
    %p52 = scmp.ne.s32.totalorder %s38, %s39
    %p53 = scmp.eq.s32.totalorder %s17, 1
    %p54 = por %p52, %p53
    %p56 = scmp.ne.s32.totalorder %s39, %s55
    %p57 = scmp.eq.s32.totalorder %s17, 0
    %p58 = por %p56, %p57
    %s60 = sadd.s32 %s59, 1
    %p63 = scmp.eq.s32.totalorder %s11, 1
    %p64 = scmp.ne.s32.totalorder %s59, %s61
    %p65 = scmp.eq.s32.totalorder %s11, 0
    %p66 = por %p64, %p65
    %p67 = scmp.ne.s32.totalorder %s59, %s61
    %p68 = scmp.eq.s32.totalorder %s16, 1
    %p69 = por %p67, %p68
    %p70 = scmp.ne.s32.totalorder %s61, %s62
    %p71 = scmp.eq.s32.totalorder %s16, 0
    %p72 = por %p70, %p71
    %p73 = scmp.ne.s32.totalorder %s61, %s62
    %p74 = scmp.eq.s32.totalorder %s17, 1
    %p75 = por %p73, %p74
    %p77 = scmp.ne.s32.totalorder %s62, %s76
    %p78 = scmp.eq.s32.totalorder %s17, 0
    %p79 = por %p77, %p78
    %s80 = ssub.s32 %s18, %s30
    %p81 = scmp.eq.s32.totalorder %s80, 0
    %s83 = sadd.s32 %s82, 1
    %s84 = scalar_select %p81, %s82, %s83
    %p87 = pneg %p81
    %p88 = scmp.eq.s32.totalorder %s11, 1
    %p89 = por %p87, %p88
    %p90 = scmp.ne.s32.totalorder %s82, %s85
    %p91 = scmp.eq.s32.totalorder %s11, 0
    %p92 = por %p90, %p91
    %p93 = scmp.ne.s32.totalorder %s82, %s85
    %p94 = scmp.eq.s32.totalorder %s16, 1
    %p95 = por %p93, %p94
    %p96 = scmp.ne.s32.totalorder %s85, %s86
    %p97 = scmp.eq.s32.totalorder %s16, 0
    %p98 = por %p96, %p97
    %p99 = scmp.ne.s32.totalorder %s85, %s86
    %p100 = scmp.eq.s32.totalorder %s17, 1
    %p101 = por %p99, %p100
    %p103 = scmp.ne.s32.totalorder %s86, %s102
    %p104 = scmp.eq.s32.totalorder %s17, 0
    %p105 = por %p103, %p104
    %s107 = sadd.s32 %s106, 1
    %p110 = scmp.eq.s32.totalorder %s11, 1
    %p111 = scmp.ne.s32.totalorder %s106, %s108
    %p112 = scmp.eq.s32.totalorder %s11, 0
    %p113 = por %p111, %p112
    %p114 = scmp.ne.s32.totalorder %s106, %s108
    %p115 = scmp.eq.s32.totalorder %s16, 1
    %p116 = por %p114, %p115
    %p117 = scmp.ne.s32.totalorder %s108, %s109
    %p118 = scmp.eq.s32.totalorder %s16, 0
    %p119 = por %p117, %p118
    %p120 = scmp.ne.s32.totalorder %s108, %s109
    %p121 = scmp.eq.s32.totalorder %s17, 1
    %p122 = por %p120, %p121
    %p124 = scmp.ne.s32.totalorder %s109, %s123
    %p125 = scmp.eq.s32.totalorder %s17, 0
    %p126 = por %p124, %p125
    %s128 = sadd.s32 %s127, 1
    %p131 = scmp.eq.s32.totalorder %s11, 1
    %p132 = scmp.ne.s32.totalorder %s127, %s129
    %p133 = scmp.eq.s32.totalorder %s11, 0
    %p134 = por %p132, %p133
    %p135 = scmp.ne.s32.totalorder %s127, %s129
    %p136 = scmp.eq.s32.totalorder %s16, 1
    %p137 = por %p135, %p136
    %p138 = scmp.ne.s32.totalorder %s129, %s130
    %p139 = scmp.eq.s32.totalorder %s16, 0
    %p140 = por %p138, %p139
    %p141 = scmp.ne.s32.totalorder %s129, %s130
    %p142 = scmp.eq.s32.totalorder %s17, 1
    %p143 = por %p141, %p142
    %p145 = scmp.ne.s32.totalorder %s130, %s144
    %p146 = scmp.eq.s32.totalorder %s17, 0
    %p147 = por %p145, %p146
    %s148 = ssub.s32 %s18, %s30
    %p149 = scmp.eq.s32.totalorder %s148, 0
    %s151 = sadd.s32 %s150, 1
    %s152 = scalar_select %p149, %s150, %s151
    %p155 = pneg %p149
    %p156 = scmp.eq.s32.totalorder %s11, 1
    %p157 = por %p155, %p156
    %p158 = scmp.ne.s32.totalorder %s150, %s153
    %p159 = scmp.eq.s32.totalorder %s11, 0
    %p160 = por %p158, %p159
    %p161 = scmp.ne.s32.totalorder %s150, %s153
    %p162 = scmp.eq.s32.totalorder %s16, 1
    %p163 = por %p161, %p162
    %p164 = scmp.ne.s32.totalorder %s153, %s154
    %p165 = scmp.eq.s32.totalorder %s16, 0
    %p166 = por %p164, %p165
    %p167 = scmp.ne.s32.totalorder %s153, %s154
    %p168 = scmp.eq.s32.totalorder %s17, 1
    %p169 = por %p167, %p168
    %p171 = scmp.ne.s32.totalorder %s154, %s170
    %p172 = scmp.eq.s32.totalorder %s17, 0
    %p173 = por %p171, %p172
    %p174 = scmp.le.s32.totalorder 1, %s11
    %p175 = scmp.lt.s32.totalorder %s11, 3
    %p176 = pnand %p174, %p175
    %p177 = pneg %p176
    // Predicated region
    $region9: #{graphsage_forward.7} parent=5 // pred_check
      _
    $region10: #{graphsage_forward.7} parent=5 // pred_check_branch
      %179 = sbr.rel (%p176) target = $region12
    $region11: #{graphsage_forward.7} parent=5 // pred_region
      %s180 = ssub.s32 %s11, 1
      // Predicated region
      $region13: #{graphsage_forward.7} parent=11 // pred_check
        %p181 = pneg %p72
      $region14: #{graphsage_forward.7} parent=11 // pred_check_branch
        %183 = sbr.rel (%p181) target = $region16
      $region15: #{graphsage_forward.7} parent=11 // pred_region
        _
      $region16: #{graphsage_forward.7} parent=11 // pred_fallthru
        _
      // Predicated region
      $region17: #{graphsage_forward.7} parent=11 // pred_check
        %p184 = pneg %p119
      $region18: #{graphsage_forward.7} parent=11 // pred_check_branch
        %186 = sbr.rel (%p184) target = $region20
      $region19: #{graphsage_forward.7} parent=11 // pred_region
        _
      $region20: #{graphsage_forward.7} parent=11 // pred_fallthru
        _
      // Predicated region
      $region21: #{graphsage_forward.7} parent=11 // pred_check
        %p187 = pneg %p140
      $region22: #{graphsage_forward.7} parent=11 // pred_check_branch
        %189 = sbr.rel (%p187) target = $region24
      $region23: #{graphsage_forward.7} parent=11 // pred_region
        _
      $region24: #{graphsage_forward.7} parent=11 // pred_fallthru
        _
    $region12: #{graphsage_forward.7} parent=5 // pred_fallthru
      _
    %p190 = scmp.lt.s32.totalorder %s11, 2
    // Predicated region
    $region25: #{graphsage_forward.7} parent=5 // pred_check
      %p191 = pneg %p190
    $region26: #{graphsage_forward.7} parent=5 // pred_check_branch
      %193 = sbr.rel (%p191) target = $region28
    $region27: #{graphsage_forward.7} parent=5 // pred_region
      // Predicated region
      $region29: #{graphsage_forward.7} parent=27 // pred_check
        %p194 = pneg %p45
      $region30: #{graphsage_forward.7} parent=27 // pred_check_branch
        %196 = sbr.rel (%p194) target = $region32
      $region31: #{graphsage_forward.7} parent=27 // pred_region
        %s197 = smul.u32 16, %s18
        %s198 = smul.u32 2, %s19
        %p199 = scmp.lt.s32.totalorder %s197, 31
        %s200 = scalar_select %p199, %s197, 31
        %p201 = scmp.lt.s32.totalorder %s198, 1
        %s202 = scalar_select %p201, %s198, 1
        %s203 = smul.addr %s200, 2
        %s204 = sadd.s32 %s202, %s203
        %s205 = smul.addr %s204, 4
        %s206 = scalar_lea.vmem %s0, %s205
        %s207 = smul.u32 16, %s18
        %s208 = smul.u32 2, %s19
      $region32: #{graphsage_forward.7} parent=27 // pred_fallthru
        _
      // Predicated region
      $region33: #{graphsage_forward.7} parent=27 // pred_check
        %p209 = pneg %p92
      $region34: #{graphsage_forward.7} parent=27 // pred_check_branch
        %211 = sbr.rel (%p209) target = $region36
      $region35: #{graphsage_forward.7} parent=27 // pred_region
        %s212 = smul.u32 16, %s18
        %p213 = scmp.lt.s32.totalorder %s212, 31
        %s214 = scalar_select %p213, %s212, 31
        %s215 = smul.addr %s214, 4
        %s216 = scalar_lea.vmem %s2, %s215
        %s217 = smul.u32 16, %s18
      $region36: #{graphsage_forward.7} parent=27 // pred_fallthru
        _
    $region28: #{graphsage_forward.7} parent=5 // pred_fallthru
      _
    %p218 = scmp.le.s32.totalorder 1, %s11
    %p219 = scmp.lt.s32.totalorder %s11, 3
    %p220 = pnand %p218, %p219
    %p221 = pneg %p220
    // Predicated region
    $region37: #{graphsage_forward.7} parent=5 // pred_check
      _
    $region38: #{graphsage_forward.7} parent=5 // pred_check_branch
      %223 = sbr.rel (%p220) target = $region40
    $region39: #{graphsage_forward.7} parent=5 // pred_region
      %s224 = ssub.s32 %s11, 1
      %s225 = smul.u32 16, %s20
      %s226 = smul.u32 2, %s21
      %p227 = scmp.lt.s32.totalorder %s225, 31
      %s228 = scalar_select %p227, %s225, 31
      %p229 = scmp.lt.s32.totalorder %s226, 1
      %s230 = scalar_select %p229, %s226, 1
      %s231 = smul.addr %s228, 2
      %s232 = sadd.s32 %s230, %s231
      %s233 = smul.addr %s232, 4
      %s234 = scalar_lea.vmem %s0, %s233
      %p235 = pneg %p51
      %p236 = pneg %p48
      %p237 = pneg %p72
      %p238 = pneg %p69
      %s239 = smul.u32 16, %s20
      %p240 = scmp.lt.s32.totalorder %s239, 31
      %s241 = scalar_select %p240, %s239, 31
      %s242 = smul.addr %s241, 4
      %s243 = scalar_lea.vmem %s2, %s242
      %p244 = pneg %p98
      %p245 = pneg %p95
      %p246 = pneg %p119
      %p247 = pneg %p116
      %p248 = pneg %p140
      %p249 = pneg %p137
      %p250 = pneg %p166
      %p251 = pneg %p163
      %s252 = smul.u32 16, %s20
      %p253 = scmp.lt.s32.totalorder %s252, 31
      %s254 = scalar_select %p253, %s252, 31
      %s255 = smul.addr %s254, 8
      %s256 = scalar_lea.vmem %s5, %s255
      %s257 = smul.u32 16, %s20
      %s258 = smul.u32 2, %s21
      %p259 = scmp.lt.s32.totalorder %s257, 31
      %s260 = scalar_select %p259, %s257, 31
      %p261 = scmp.lt.s32.totalorder %s258, 1
      %s262 = scalar_select %p261, %s258, 1
      %s263 = smul.addr %s260, 2
      %s264 = sadd.s32 %s262, %s263
      %s265 = smul.addr %s264, 4
      %s266 = scalar_lea.vmem %s0, %s265
      %s267 = smul.u32 16, %s20
      %s268 = smul.u32 2, %s21
      %s269 = smul.u32 16, %s20
      %p270 = scmp.lt.s32.totalorder %s269, 31
      %s271 = scalar_select %p270, %s269, 31
      %s272 = smul.addr %s271, 4
      %s273 = scalar_lea.vmem %s2, %s272
      %s274 = smul.u32 16, %s20
      %s275 = smul.u32 16, %s20
      %p276 = scmp.lt.s32.totalorder %s275, 31
      %s277 = scalar_select %p276, %s275, 31
      %s278 = smul.addr %s277, 8
      %s279 = scalar_lea.vmem %s5, %s278
      %s280 = smul.u32 16, %s20
      %p281 = scmp.eq.s32.totalorder %s21, 0
      // Predicated region
      $region41: #{graphsage_forward.7} parent=39 // pred_check
        %p282 = pneg %p281
      $region42: #{graphsage_forward.7} parent=39 // pred_check_branch
        %284 = sbr.rel (%p282) target = $region44
      $region43: #{graphsage_forward.7} parent=39 // pred_region
        %285 = vst [vmem:[#allocation2] sm:$0xff] 0.0
        %286 = vst [vmem:[#allocation2 + $0x8] sm:$0xff] 0.0
        %287 = vst [vmem:[#allocation2 + $0x10] sm:$0xff] 0.0
        %288 = vst [vmem:[#allocation2 + $0x18] sm:$0xff] 0.0
        %289 = vst [vmem:[#allocation2 + $0x20] sm:$0xff] 0.0
        %290 = vst [vmem:[#allocation2 + $0x28] sm:$0xff] 0.0
        %291 = vst [vmem:[#allocation2 + $0x30] sm:$0xff] 0.0
        %292 = vst [vmem:[#allocation2 + $0x38] sm:$0xff] 0.0
        %293 = vst [vmem:[#allocation2 + $0x40] sm:$0xff] 0.0
        %294 = vst [vmem:[#allocation2 + $0x48] sm:$0xff] 0.0
        %295 = vst [vmem:[#allocation2 + $0x50] sm:$0xff] 0.0
        %296 = vst [vmem:[#allocation2 + $0x58] sm:$0xff] 0.0
        %297 = vst [vmem:[#allocation2 + $0x60] sm:$0xff] 0.0
        %298 = vst [vmem:[#allocation2 + $0x68] sm:$0xff] 0.0
        %299 = vst [vmem:[#allocation2 + $0x70] sm:$0xff] 0.0
        %300 = vst [vmem:[#allocation2 + $0x78] sm:$0xff] 0.0
      $region44: #{graphsage_forward.7} parent=39 // pred_fallthru
        _
      %s301 = smul.u32 %s21, 256
      %s302 = sshra.s32 %s301, 3
      %s303 = sand.u32 %s301, 7
      %s304 = smul.addr %s302, 4
      %s305 = scalar_lea.vmem %s1, %s304
      %v306 = vld [vmem:[%s305] sm:$0xf]
      %v307 = vld [vmem:[%s305 + $0x4] sm:$0xf]
      %v308 = vld [vmem:[%s305 + $0x8] sm:$0xf]
      %v309 = vld [vmem:[%s305 + $0xc] sm:$0xf]
      %v310 = vld [vmem:[%s305 + $0x10] sm:$0xf]
      %v311 = vld [vmem:[%s305 + $0x14] sm:$0xf]
      %v312 = vld [vmem:[%s305 + $0x18] sm:$0xf]
      %v313 = vld [vmem:[%s305 + $0x1c] sm:$0xf]
      %v314 = vld [vmem:[%s305 + $0x20] sm:$0xf]
      %v315 = vld [vmem:[%s305 + $0x24] sm:$0xf]
      %v316 = vld [vmem:[%s305 + $0x28] sm:$0xf]
      %v317 = vld [vmem:[%s305 + $0x2c] sm:$0xf]
      %v318 = vld [vmem:[%s305 + $0x30] sm:$0xf]
      %v319 = vld [vmem:[%s305 + $0x34] sm:$0xf]
      %v320 = vld [vmem:[%s305 + $0x38] sm:$0xf]
      %v321 = vld [vmem:[%s305 + $0x3c] sm:$0xf]
      %v322 = vld [vmem:[%s305 + $0x40] sm:$0xf]
      %v323 = vld [vmem:[%s305 + $0x44] sm:$0xf]
      %v324 = vld [vmem:[%s305 + $0x48] sm:$0xf]
      %v325 = vld [vmem:[%s305 + $0x4c] sm:$0xf]
      %v326 = vld [vmem:[%s305 + $0x50] sm:$0xf]
      %v327 = vld [vmem:[%s305 + $0x54] sm:$0xf]
      %v328 = vld [vmem:[%s305 + $0x58] sm:$0xf]
      %v329 = vld [vmem:[%s305 + $0x5c] sm:$0xf]
      %v330 = vld [vmem:[%s305 + $0x60] sm:$0xf]
      %v331 = vld [vmem:[%s305 + $0x64] sm:$0xf]
      %v332 = vld [vmem:[%s305 + $0x68] sm:$0xf]
      %v333 = vld [vmem:[%s305 + $0x6c] sm:$0xf]
      %v334 = vld [vmem:[%s305 + $0x70] sm:$0xf]
      %v335 = vld [vmem:[%s305 + $0x74] sm:$0xf]
      %v336 = vld [vmem:[%s305 + $0x78] sm:$0xf]
      %v337 = vld [vmem:[%s305 + $0x7c] sm:$0xf]
      %v338 = vld [vmem:[#allocation2] sm:$0xff]
      %v339 = vld [vmem:[#allocation2 + $0x8] sm:$0xff]
      %v340 = vld [vmem:[#allocation2 + $0x10] sm:$0xff]
      %v341 = vld [vmem:[#allocation2 + $0x18] sm:$0xff]
      %v342 = vld [vmem:[#allocation2 + $0x20] sm:$0xff]
      %v343 = vld [vmem:[#allocation2 + $0x28] sm:$0xff]
      %v344 = vld [vmem:[#allocation2 + $0x30] sm:$0xff]
      %v345 = vld [vmem:[#allocation2 + $0x38] sm:$0xff]
      %v346 = vld [vmem:[#allocation2 + $0x40] sm:$0xff]
      %v347 = vld [vmem:[#allocation2 + $0x48] sm:$0xff]
      %v348 = vld [vmem:[#allocation2 + $0x50] sm:$0xff]
      %v349 = vld [vmem:[#allocation2 + $0x58] sm:$0xff]
      %v350 = vld [vmem:[#allocation2 + $0x60] sm:$0xff]
      %v351 = vld [vmem:[#allocation2 + $0x68] sm:$0xff]
      %v352 = vld [vmem:[#allocation2 + $0x70] sm:$0xff]
      %v353 = vld [vmem:[#allocation2 + $0x78] sm:$0xff]
      %v354 = vld [vmem:[%s266] sm:$0xff]
      %v355 = vld [vmem:[%s266 + $0x8] sm:$0xff]
      %v356 = vld [vmem:[%s266 + $0x10] sm:$0xff]
      %v357 = vld [vmem:[%s266 + $0x18] sm:$0xff]
      %v358 = vld [vmem:[%s266 + $0x20] sm:$0xff]
      %v359 = vld [vmem:[%s266 + $0x28] sm:$0xff]
      %v360 = vld [vmem:[%s266 + $0x30] sm:$0xff]
      %v361 = vld [vmem:[%s266 + $0x38] sm:$0xff]
      %v362 = vld [vmem:[%s266 + $0x40] sm:$0xff]
      %v363 = vld [vmem:[%s266 + $0x48] sm:$0xff]
      %v364 = vld [vmem:[%s266 + $0x50] sm:$0xff]
      %v365 = vld [vmem:[%s266 + $0x58] sm:$0xff]
      %v366 = vld [vmem:[%s266 + $0x60] sm:$0xff]
      %v367 = vld [vmem:[%s266 + $0x68] sm:$0xff]
      %v368 = vld [vmem:[%s266 + $0x70] sm:$0xff]
      %v369 = vld [vmem:[%s266 + $0x78] sm:$0xff]
      %v386 = vunpack.c.l.b16 %v354
      %v387 = vunpack.c.h.b16 %v354
      %v388 = vunpack.c.l.b16 %v355
      %v389 = vunpack.c.h.b16 %v355
      %v390 = vunpack.c.l.b16 %v356
      %v391 = vunpack.c.h.b16 %v356
      %v392 = vunpack.c.l.b16 %v357
      %v393 = vunpack.c.h.b16 %v357
      %v394 = vunpack.c.l.b16 %v358
      %v395 = vunpack.c.h.b16 %v358
      %v396 = vunpack.c.l.b16 %v359
      %v397 = vunpack.c.h.b16 %v359
      %v398 = vunpack.c.l.b16 %v360
      %v399 = vunpack.c.h.b16 %v360
      %v400 = vunpack.c.l.b16 %v361
      %v401 = vunpack.c.h.b16 %v361
      %v402 = vunpack.c.l.b16 %v362
      %v403 = vunpack.c.h.b16 %v362
      %v404 = vunpack.c.l.b16 %v363
      %v405 = vunpack.c.h.b16 %v363
      %v406 = vunpack.c.l.b16 %v364
      %v407 = vunpack.c.h.b16 %v364
      %v408 = vunpack.c.l.b16 %v365
      %v409 = vunpack.c.h.b16 %v365
      %v410 = vunpack.c.l.b16 %v366
      %v411 = vunpack.c.h.b16 %v366
      %v412 = vunpack.c.l.b16 %v367
      %v413 = vunpack.c.h.b16 %v367
      %v414 = vunpack.c.l.b16 %v368
      %v415 = vunpack.c.h.b16 %v368
      %v416 = vunpack.c.l.b16 %v369
      %v417 = vunpack.c.h.b16 %v369
      %v418 = vpack.c.b16 %v388, %v386
      %v419 = vpack.c.b16 %v389, %v387
      %v420 = vpack.c.b16 %v392, %v390
      %v421 = vpack.c.b16 %v393, %v391
      %v422 = vpack.c.b16 %v396, %v394
      %v423 = vpack.c.b16 %v397, %v395
      %v424 = vpack.c.b16 %v400, %v398
      %v425 = vpack.c.b16 %v401, %v399
      %v426 = vpack.c.b16 %v404, %v402
      %v427 = vpack.c.b16 %v405, %v403
      %v428 = vpack.c.b16 %v408, %v406
      %v429 = vpack.c.b16 %v409, %v407
      %v430 = vpack.c.b16 %v412, %v410
      %v431 = vpack.c.b16 %v413, %v411
      %v432 = vpack.c.b16 %v416, %v414
      %v433 = vpack.c.b16 %v417, %v415
      %v482 = vunpack.c.l.b16 %v306
      %v483 = vunpack.c.l.b16 %v307
      %v484 = vunpack.c.l.b16 %v308
      %v485 = vunpack.c.l.b16 %v309
      %v486 = vunpack.c.l.b16 %v310
      %v487 = vunpack.c.l.b16 %v311
      %v488 = vunpack.c.l.b16 %v312
      %v489 = vunpack.c.l.b16 %v313
      %v490 = vunpack.c.l.b16 %v314
      %v491 = vunpack.c.l.b16 %v315
      %v492 = vunpack.c.l.b16 %v316
      %v493 = vunpack.c.l.b16 %v317
      %v494 = vunpack.c.l.b16 %v318
      %v495 = vunpack.c.l.b16 %v319
      %v496 = vunpack.c.l.b16 %v320
      %v497 = vunpack.c.l.b16 %v321
      %v498 = vunpack.c.l.b16 %v322
      %v499 = vunpack.c.l.b16 %v323
      %v500 = vunpack.c.l.b16 %v324
      %v501 = vunpack.c.l.b16 %v325
      %v502 = vunpack.c.l.b16 %v326
      %v503 = vunpack.c.l.b16 %v327
      %v504 = vunpack.c.l.b16 %v328
      %v505 = vunpack.c.l.b16 %v329
      %v506 = vunpack.c.l.b16 %v330
      %v507 = vunpack.c.l.b16 %v331
      %v508 = vunpack.c.l.b16 %v332
      %v509 = vunpack.c.l.b16 %v333
      %v510 = vunpack.c.l.b16 %v334
      %v511 = vunpack.c.l.b16 %v335
      %v512 = vunpack.c.l.b16 %v336
      %v513 = vunpack.c.l.b16 %v337
      %v514 = vpack.c.b16 %v483, %v482
      %v515 = vpack.c.b16 %v485, %v484
      %v516 = vpack.c.b16 %v487, %v486
      %v517 = vpack.c.b16 %v489, %v488
      %v518 = vpack.c.b16 %v491, %v490
      %v519 = vpack.c.b16 %v493, %v492
      %v520 = vpack.c.b16 %v495, %v494
      %v521 = vpack.c.b16 %v497, %v496
      %v522 = vpack.c.b16 %v499, %v498
      %v523 = vpack.c.b16 %v501, %v500
      %v524 = vpack.c.b16 %v503, %v502
      %v525 = vpack.c.b16 %v505, %v504
      %v526 = vpack.c.b16 %v507, %v506
      %v527 = vpack.c.b16 %v509, %v508
      %v528 = vpack.c.b16 %v511, %v510
      %v529 = vpack.c.b16 %v513, %v512
      %546 = vmatpush.bf16.msra.mxu0 %v521
      %547 = vmatpush.bf16.msra.mxu0 %v520
      %548 = vmatpush.bf16.msra.mxu0 %v519
      %549 = vmatpush.bf16.msra.mxu0 %v518
      %550 = vmatpush.bf16.msra.mxu0 %v517
      %551 = vmatpush.bf16.msra.mxu0 %v516
      %552 = vmatpush.bf16.msra.mxu0 %v515
      %553 = vmatpush.bf16.msra.mxu0 %v514
      %554 = vmatmul.bf16.gmra.mxu0 %v418
      %v555 = vpop.f32.mrf.mxu0
      %v556 = vadd.f32 0.0, %v555
      %v557 = vpop.f32.mrf.mxu0
      %v558 = vadd.f32 0.0, %v557
      %559 = vmatmul.bf16.gmra.mxu0 %v420
      %v560 = vpop.f32.mrf.mxu0
      %v561 = vadd.f32 0.0, %v560
      %v562 = vpop.f32.mrf.mxu0
      %v563 = vadd.f32 0.0, %v562
      %564 = vmatmul.bf16.gmra.mxu0 %v422
      %v565 = vpop.f32.mrf.mxu0
      %v566 = vadd.f32 0.0, %v565
      %v567 = vpop.f32.mrf.mxu0
      %v568 = vadd.f32 0.0, %v567
      %569 = vmatmul.bf16.gmra.mxu0 %v424
      %v570 = vpop.f32.mrf.mxu0
      %v571 = vadd.f32 0.0, %v570
      %v572 = vpop.f32.mrf.mxu0
      %v573 = vadd.f32 0.0, %v572
      %574 = vmatmul.bf16.gmra.mxu0 %v426
      %v575 = vpop.f32.mrf.mxu0
      %v576 = vadd.f32 0.0, %v575
      %v577 = vpop.f32.mrf.mxu0
      %v578 = vadd.f32 0.0, %v577
      %579 = vmatmul.bf16.gmra.mxu0 %v428
      %v580 = vpop.f32.mrf.mxu0
      %v581 = vadd.f32 0.0, %v580
      %v582 = vpop.f32.mrf.mxu0
      %v583 = vadd.f32 0.0, %v582
      %584 = vmatmul.bf16.gmra.mxu0 %v430
      %v585 = vpop.f32.mrf.mxu0
      %v586 = vadd.f32 0.0, %v585
      %v587 = vpop.f32.mrf.mxu0
      %v588 = vadd.f32 0.0, %v587
      %589 = vmatmul.bf16.gmra.mxu0 %v432
      %v590 = vpop.f32.mrf.mxu0
      %v591 = vadd.f32 0.0, %v590
      %v592 = vpop.f32.mrf.mxu0
      %v593 = vadd.f32 0.0, %v592
      %594 = vdwg.mxu0
      %595 = vmatpush.bf16.msra.mxu0 %v529
      %596 = vmatpush.bf16.msra.mxu0 %v528
      %597 = vmatpush.bf16.msra.mxu0 %v527
      %598 = vmatpush.bf16.msra.mxu0 %v526
      %599 = vmatpush.bf16.msra.mxu0 %v525
      %600 = vmatpush.bf16.msra.mxu0 %v524
      %601 = vmatpush.bf16.msra.mxu0 %v523
      %602 = vmatpush.bf16.msra.mxu0 %v522
      %603 = vmatmul.bf16.gmra.mxu0 %v419
      %v604 = vpop.f32.mrf.mxu0
      %v605 = vadd.f32 %v556, %v604
      %v606 = vpop.f32.mrf.mxu0
      %v607 = vadd.f32 %v558, %v606
      %608 = vmatmul.bf16.gmra.mxu0 %v421
      %v609 = vpop.f32.mrf.mxu0
      %v610 = vadd.f32 %v561, %v609
      %v611 = vpop.f32.mrf.mxu0
      %v612 = vadd.f32 %v563, %v611
      %613 = vmatmul.bf16.gmra.mxu0 %v423
      %v614 = vpop.f32.mrf.mxu0
      %v615 = vadd.f32 %v566, %v614
      %v616 = vpop.f32.mrf.mxu0
      %v617 = vadd.f32 %v568, %v616
      %618 = vmatmul.bf16.gmra.mxu0 %v425
      %v619 = vpop.f32.mrf.mxu0
      %v620 = vadd.f32 %v571, %v619
      %v621 = vpop.f32.mrf.mxu0
      %v622 = vadd.f32 %v573, %v621
      %623 = vmatmul.bf16.gmra.mxu0 %v427
      %v624 = vpop.f32.mrf.mxu0
      %v625 = vadd.f32 %v576, %v624
      %v626 = vpop.f32.mrf.mxu0
      %v627 = vadd.f32 %v578, %v626
      %628 = vmatmul.bf16.gmra.mxu0 %v429
      %v629 = vpop.f32.mrf.mxu0
      %v630 = vadd.f32 %v581, %v629
      %v631 = vpop.f32.mrf.mxu0
      %v632 = vadd.f32 %v583, %v631
      %633 = vmatmul.bf16.gmra.mxu0 %v431
      %v634 = vpop.f32.mrf.mxu0
      %v635 = vadd.f32 %v586, %v634
      %v636 = vpop.f32.mrf.mxu0
      %v637 = vadd.f32 %v588, %v636
      %638 = vmatmul.bf16.gmra.mxu0 %v433
      %v639 = vpop.f32.mrf.mxu0
      %v640 = vadd.f32 %v591, %v639
      %v641 = vpop.f32.mrf.mxu0
      %v642 = vadd.f32 %v593, %v641
      %643 = vdwg.mxu0
      %v644 = vadd.f32 %v338, %v605
      %v645 = vadd.f32 %v339, %v607
      %v646 = vadd.f32 %v340, %v610
      %v647 = vadd.f32 %v341, %v612
      %v648 = vadd.f32 %v342, %v615
      %v649 = vadd.f32 %v343, %v617
      %v650 = vadd.f32 %v344, %v620
      %v651 = vadd.f32 %v345, %v622
      %v652 = vadd.f32 %v346, %v625
      %v653 = vadd.f32 %v347, %v627
      %v654 = vadd.f32 %v348, %v630
      %v655 = vadd.f32 %v349, %v632
      %v656 = vadd.f32 %v350, %v635
      %v657 = vadd.f32 %v351, %v637
      %v658 = vadd.f32 %v352, %v640
      %v659 = vadd.f32 %v353, %v642
      %660 = vst [vmem:[#allocation2] sm:$0xff] %v644
      %661 = vst [vmem:[#allocation2 + $0x8] sm:$0xff] %v645
      %662 = vst [vmem:[#allocation2 + $0x10] sm:$0xff] %v646
      %663 = vst [vmem:[#allocation2 + $0x18] sm:$0xff] %v647
      %664 = vst [vmem:[#allocation2 + $0x20] sm:$0xff] %v648
      %665 = vst [vmem:[#allocation2 + $0x28] sm:$0xff] %v649
      %666 = vst [vmem:[#allocation2 + $0x30] sm:$0xff] %v650
      %667 = vst [vmem:[#allocation2 + $0x38] sm:$0xff] %v651
      %668 = vst [vmem:[#allocation2 + $0x40] sm:$0xff] %v652
      %669 = vst [vmem:[#allocation2 + $0x48] sm:$0xff] %v653
      %670 = vst [vmem:[#allocation2 + $0x50] sm:$0xff] %v654
      %671 = vst [vmem:[#allocation2 + $0x58] sm:$0xff] %v655
      %672 = vst [vmem:[#allocation2 + $0x60] sm:$0xff] %v656
      %673 = vst [vmem:[#allocation2 + $0x68] sm:$0xff] %v657
      %674 = vst [vmem:[#allocation2 + $0x70] sm:$0xff] %v658
      %675 = vst [vmem:[#allocation2 + $0x78] sm:$0xff] %v659
      // Predicated region
      $region45: #{graphsage_forward.7} parent=39 // pred_check
        %p676 = pneg %p281
      $region46: #{graphsage_forward.7} parent=39 // pred_check_branch
        %678 = sbr.rel (%p676) target = $region48
      $region47: #{graphsage_forward.7} parent=39 // pred_region
        %v679 = vld [vmem:[#allocation2] sm:$0xff]
        %v680 = vld [vmem:[#allocation2 + $0x8] sm:$0xff]
        %v681 = vld [vmem:[#allocation2 + $0x10] sm:$0xff]
        %v682 = vld [vmem:[#allocation2 + $0x18] sm:$0xff]
        %v683 = vld [vmem:[#allocation2 + $0x20] sm:$0xff]
        %v684 = vld [vmem:[#allocation2 + $0x28] sm:$0xff]
        %v685 = vld [vmem:[#allocation2 + $0x30] sm:$0xff]
        %v686 = vld [vmem:[#allocation2 + $0x38] sm:$0xff]
        %v687 = vld [vmem:[#allocation2 + $0x40] sm:$0xff]
        %v688 = vld [vmem:[#allocation2 + $0x48] sm:$0xff]
        %v689 = vld [vmem:[#allocation2 + $0x50] sm:$0xff]
        %v690 = vld [vmem:[#allocation2 + $0x58] sm:$0xff]
        %v691 = vld [vmem:[#allocation2 + $0x60] sm:$0xff]
        %v692 = vld [vmem:[#allocation2 + $0x68] sm:$0xff]
        %v693 = vld [vmem:[#allocation2 + $0x70] sm:$0xff]
        %v694 = vld [vmem:[#allocation2 + $0x78] sm:$0xff]
        %v695 = vld [vmem:[%s273] sm:$0xf]
        %v696 = vld [vmem:[%s273 + $0x4] sm:$0xf]
        %v697 = vld [vmem:[%s273 + $0x8] sm:$0xf]
        %v698 = vld [vmem:[%s273 + $0xc] sm:$0xf]
        %v699 = vld [vmem:[%s273 + $0x10] sm:$0xf]
        %v700 = vld [vmem:[%s273 + $0x14] sm:$0xf]
        %v701 = vld [vmem:[%s273 + $0x18] sm:$0xf]
        %v702 = vld [vmem:[%s273 + $0x1c] sm:$0xf]
        %v703 = vld [vmem:[%s273 + $0x20] sm:$0xf]
        %v704 = vld [vmem:[%s273 + $0x24] sm:$0xf]
        %v705 = vld [vmem:[%s273 + $0x28] sm:$0xf]
        %v706 = vld [vmem:[%s273 + $0x2c] sm:$0xf]
        %v707 = vld [vmem:[%s273 + $0x30] sm:$0xf]
        %v708 = vld [vmem:[%s273 + $0x34] sm:$0xf]
        %v709 = vld [vmem:[%s273 + $0x38] sm:$0xf]
        %v710 = vld [vmem:[%s273 + $0x3c] sm:$0xf]
        %v711 = vld [vmem:[%s3] sm:$0xf]
        %v712 = vld [vmem:[%s3 + $0x4] sm:$0xf]
        %v713 = vld [vmem:[%s3 + $0x8] sm:$0xf]
        %v714 = vld [vmem:[%s3 + $0xc] sm:$0xf]
        %v715 = vld [vmem:[%s3 + $0x10] sm:$0xf]
        %v716 = vld [vmem:[%s3 + $0x14] sm:$0xf]
        %v717 = vld [vmem:[%s3 + $0x18] sm:$0xf]
        %v718 = vld [vmem:[%s3 + $0x1c] sm:$0xf]
        %v719 = vld [vmem:[%s3 + $0x20] sm:$0xf]
        %v720 = vld [vmem:[%s3 + $0x24] sm:$0xf]
        %v721 = vld [vmem:[%s3 + $0x28] sm:$0xf]
        %v722 = vld [vmem:[%s3 + $0x2c] sm:$0xf]
        %v723 = vld [vmem:[%s3 + $0x30] sm:$0xf]
        %v724 = vld [vmem:[%s3 + $0x34] sm:$0xf]
        %v725 = vld [vmem:[%s3 + $0x38] sm:$0xf]
        %v726 = vld [vmem:[%s3 + $0x3c] sm:$0xf]
        %v743 = vunpack.c.l.b16 %v695
        %v744 = vunpack.c.l.b16 %v696
        %v745 = vunpack.c.l.b16 %v697
        %v746 = vunpack.c.l.b16 %v698
        %v747 = vunpack.c.l.b16 %v699
        %v748 = vunpack.c.l.b16 %v700
        %v749 = vunpack.c.l.b16 %v701
        %v750 = vunpack.c.l.b16 %v702
        %v751 = vunpack.c.l.b16 %v703
        %v752 = vunpack.c.l.b16 %v704
        %v753 = vunpack.c.l.b16 %v705
        %v754 = vunpack.c.l.b16 %v706
        %v755 = vunpack.c.l.b16 %v707
        %v756 = vunpack.c.l.b16 %v708
        %v757 = vunpack.c.l.b16 %v709
        %v758 = vunpack.c.l.b16 %v710
        %v759 = vpack.c.b16 %v744, %v743
        %v760 = vpack.c.b16 %v746, %v745
        %v761 = vpack.c.b16 %v748, %v747
        %v762 = vpack.c.b16 %v750, %v749
        %v763 = vpack.c.b16 %v752, %v751
        %v764 = vpack.c.b16 %v754, %v753
        %v765 = vpack.c.b16 %v756, %v755
        %v766 = vpack.c.b16 %v758, %v757
        %v791 = vunpack.c.l.b16 %v711
        %v792 = vunpack.c.l.b16 %v712
        %v793 = vunpack.c.l.b16 %v713
        %v794 = vunpack.c.l.b16 %v714
        %v795 = vunpack.c.l.b16 %v715
        %v796 = vunpack.c.l.b16 %v716
        %v797 = vunpack.c.l.b16 %v717
        %v798 = vunpack.c.l.b16 %v718
        %v799 = vunpack.c.l.b16 %v719
        %v800 = vunpack.c.l.b16 %v720
        %v801 = vunpack.c.l.b16 %v721
        %v802 = vunpack.c.l.b16 %v722
        %v803 = vunpack.c.l.b16 %v723
        %v804 = vunpack.c.l.b16 %v724
        %v805 = vunpack.c.l.b16 %v725
        %v806 = vunpack.c.l.b16 %v726
        %v807 = vpack.c.b16 %v792, %v791
        %v808 = vpack.c.b16 %v794, %v793
        %v809 = vpack.c.b16 %v796, %v795
        %v810 = vpack.c.b16 %v798, %v797
        %v811 = vpack.c.b16 %v800, %v799
        %v812 = vpack.c.b16 %v802, %v801
        %v813 = vpack.c.b16 %v804, %v803
        %v814 = vpack.c.b16 %v806, %v805
        %823 = vmatpush.bf16.msra.mxu0 %v814
        %824 = vmatpush.bf16.msra.mxu0 %v813
        %825 = vmatpush.bf16.msra.mxu0 %v812
        %826 = vmatpush.bf16.msra.mxu0 %v811
        %827 = vmatpush.bf16.msra.mxu0 %v810
        %828 = vmatpush.bf16.msra.mxu0 %v809
        %829 = vmatpush.bf16.msra.mxu0 %v808
        %830 = vmatpush.bf16.msra.mxu0 %v807
        %831 = vmatmul.bf16.gmra.mxu0 %v759
        %v832 = vpop.f32.mrf.mxu0
        %v833 = vadd.f32 0.0, %v832
        %v834 = vpop.f32.mrf.mxu0
        %v835 = vadd.f32 0.0, %v834
        %836 = vmatmul.bf16.gmra.mxu0 %v760
        %v837 = vpop.f32.mrf.mxu0
        %v838 = vadd.f32 0.0, %v837
        %v839 = vpop.f32.mrf.mxu0
        %v840 = vadd.f32 0.0, %v839
        %841 = vmatmul.bf16.gmra.mxu0 %v761
        %v842 = vpop.f32.mrf.mxu0
        %v843 = vadd.f32 0.0, %v842
        %v844 = vpop.f32.mrf.mxu0
        %v845 = vadd.f32 0.0, %v844
        %846 = vmatmul.bf16.gmra.mxu0 %v762
        %v847 = vpop.f32.mrf.mxu0
        %v848 = vadd.f32 0.0, %v847
        %v849 = vpop.f32.mrf.mxu0
        %v850 = vadd.f32 0.0, %v849
        %851 = vmatmul.bf16.gmra.mxu0 %v763
        %v852 = vpop.f32.mrf.mxu0
        %v853 = vadd.f32 0.0, %v852
        %v854 = vpop.f32.mrf.mxu0
        %v855 = vadd.f32 0.0, %v854
        %856 = vmatmul.bf16.gmra.mxu0 %v764
        %v857 = vpop.f32.mrf.mxu0
        %v858 = vadd.f32 0.0, %v857
        %v859 = vpop.f32.mrf.mxu0
        %v860 = vadd.f32 0.0, %v859
        %861 = vmatmul.bf16.gmra.mxu0 %v765
        %v862 = vpop.f32.mrf.mxu0
        %v863 = vadd.f32 0.0, %v862
        %v864 = vpop.f32.mrf.mxu0
        %v865 = vadd.f32 0.0, %v864
        %866 = vmatmul.bf16.gmra.mxu0 %v766
        %v867 = vpop.f32.mrf.mxu0
        %v868 = vadd.f32 0.0, %v867
        %v869 = vpop.f32.mrf.mxu0
        %v870 = vadd.f32 0.0, %v869
        %871 = vdwg.mxu0
        %v872 = vadd.f32 %v679, %v833
        %v873 = vadd.f32 %v680, %v835
        %v874 = vadd.f32 %v681, %v838
        %v875 = vadd.f32 %v682, %v840
        %v876 = vadd.f32 %v683, %v843
        %v877 = vadd.f32 %v684, %v845
        %v878 = vadd.f32 %v685, %v848
        %v879 = vadd.f32 %v686, %v850
        %v880 = vadd.f32 %v687, %v853
        %v881 = vadd.f32 %v688, %v855
        %v882 = vadd.f32 %v689, %v858
        %v883 = vadd.f32 %v690, %v860
        %v884 = vadd.f32 %v691, %v863
        %v885 = vadd.f32 %v692, %v865
        %v886 = vadd.f32 %v693, %v868
        %v887 = vadd.f32 %v694, %v870
        %v888 = vld [vmem:[%s4] sm:$0x1]
        %v890 = vperm.slane %v888, 0
        %v892 = vadd.f32 %v872, %v890
        %v893 = vadd.f32 %v873, %v890
        %v894 = vadd.f32 %v874, %v890
        %v895 = vadd.f32 %v875, %v890
        %v896 = vadd.f32 %v876, %v890
        %v897 = vadd.f32 %v877, %v890
        %v898 = vadd.f32 %v878, %v890
        %v899 = vadd.f32 %v879, %v890
        %v900 = vadd.f32 %v880, %v890
        %v901 = vadd.f32 %v881, %v890
        %v902 = vadd.f32 %v882, %v890
        %v903 = vadd.f32 %v883, %v890
        %v904 = vadd.f32 %v884, %v890
        %v905 = vadd.f32 %v885, %v890
        %v906 = vadd.f32 %v886, %v890
        %v907 = vadd.f32 %v887, %v890
        %908 = vst [vmem:[%s279] sm:$0xff] %v892
        %909 = vst [vmem:[%s279 + $0x8] sm:$0xff] %v893
        %910 = vst [vmem:[%s279 + $0x10] sm:$0xff] %v894
        %911 = vst [vmem:[%s279 + $0x18] sm:$0xff] %v895
        %912 = vst [vmem:[%s279 + $0x20] sm:$0xff] %v896
        %913 = vst [vmem:[%s279 + $0x28] sm:$0xff] %v897
        %914 = vst [vmem:[%s279 + $0x30] sm:$0xff] %v898
        %915 = vst [vmem:[%s279 + $0x38] sm:$0xff] %v899
        %916 = vst [vmem:[%s279 + $0x40] sm:$0xff] %v900
        %917 = vst [vmem:[%s279 + $0x48] sm:$0xff] %v901
        %918 = vst [vmem:[%s279 + $0x50] sm:$0xff] %v902
        %919 = vst [vmem:[%s279 + $0x58] sm:$0xff] %v903
        %920 = vst [vmem:[%s279 + $0x60] sm:$0xff] %v904
        %921 = vst [vmem:[%s279 + $0x68] sm:$0xff] %v905
        %922 = vst [vmem:[%s279 + $0x70] sm:$0xff] %v906
        %923 = vst [vmem:[%s279 + $0x78] sm:$0xff] %v907
      $region48: #{graphsage_forward.7} parent=39 // pred_fallthru
        _
      %s924 = smul.u32 16, %s20
      %p925 = scmp.lt.s32.totalorder %s924, 31
      %s926 = scalar_select %p925, %s924, 31
      %s927 = smul.addr %s926, 8
      %s928 = scalar_lea.vmem %s5, %s927
      // Predicated region
      $region49: #{graphsage_forward.7} parent=39 // pred_check
        %p929 = pneg %p163
      $region50: #{graphsage_forward.7} parent=39 // pred_check_branch
        %931 = sbr.rel (%p929) target = $region52
      $region51: #{graphsage_forward.7} parent=39 // pred_region
        %s932 = smul.u32 16, %s20
      $region52: #{graphsage_forward.7} parent=39 // pred_fallthru
        _
    $region40: #{graphsage_forward.7} parent=5 // pred_fallthru
      _
    %p933 = scmp.le.s32.totalorder 2, %s11
    // Predicated region
    $region53: #{graphsage_forward.7} parent=5 // pred_check
      %p934 = pneg %p933
    $region54: #{graphsage_forward.7} parent=5 // pred_check_branch
      %936 = sbr.rel (%p934) target = $region56
    $region55: #{graphsage_forward.7} parent=5 // pred_region
      %s937 = ssub.s32 %s11, 2
      // Predicated region
      $region57: #{graphsage_forward.7} parent=55 // pred_check
        %p938 = pneg %p169
      $region58: #{graphsage_forward.7} parent=55 // pred_check_branch
        %940 = sbr.rel (%p938) target = $region60
      $region59: #{graphsage_forward.7} parent=55 // pred_region
        %s941 = smul.u32 16, %s22
        %p942 = scmp.lt.s32.totalorder %s941, 31
        %s943 = scalar_select %p942, %s941, 31
        %s944 = smul.addr %s943, 8
        %s945 = scalar_lea.vmem %s5, %s944
      $region60: #{graphsage_forward.7} parent=55 // pred_fallthru
        _
    $region56: #{graphsage_forward.7} parent=5 // pred_fallthru
      _
  $region6: #{graphsage_forward.7} parent=0 // loop_footer
    %s15 = sadd.s32 1, %s11
  $region7: #{graphsage_forward.7} parent=0 // loop_footer_branch
    %10 = sbr.rel target = $region3
  $region8: #{graphsage_forward.7} parent=0 // loop_exit
    _

// kernel: graphsage_forward.5
$region0: #{graphsage_forward.5}
  #allocation0 [shape = 'u32[]', space=smem, size = 0x4, offset = 0x4, fixed_abs, tag = 'smem constant byte address 0x4 - core index']
  #allocation1 [shape = 'u32[72,128]{1,0:T(1,128)}', space=vmem, size = 0x9000, scoped, tag = 'internal scratch']
  #allocation2 [shape = 'f32[128,128]{1,0:T(8,128)}', space=vmem, size = 0x10000, scoped, tag = 'scratch operand']
  %s0 = inlined_call_operand.vmem [shape: bf16[256,256], index: 0, kind: input, shape index: {}]
  %s1 = inlined_call_operand.vmem [shape: bf16[256,128], index: 1, kind: input, shape index: {}]
  %s2 = inlined_call_operand.vmem [shape: bf16[256,128], index: 2, kind: input, shape index: {}]
  %s3 = inlined_call_operand.vmem [shape: bf16[128,128], index: 3, kind: input, shape index: {}]
  %s4 = inlined_call_operand.vmem [shape: f32[1,128], index: 4, kind: input, shape index: {}]
  %s5 = inlined_call_operand.vmem [shape: bf16[256,128], index: 5, kind: output, shape index: {}]
  %s6 = sld [smem:[#allocation0]]
  $region61: #{graphsage_forward.5} parent=0
    _
  %s8 = ssub.s32 1, %s6
  %s9 = scalar_select 0, %s8, %s6
  loop: start=0, step=1, limit=4
  $region2: #{graphsage_forward.5} parent=0 // loop_pre_header
    _
  $region3: #{graphsage_forward.5} parent=0 // loop_header
    %s11 = sphi 0, %s15
    %p12 = scmp.ge.s32.totalorder %s11, 4
    %s18 = sphi 0, %s30
    %s19 = sphi 0, %s26
    %s20 = sphi 0, %s18
    %s21 = sphi 0, %s19
    %s22 = sphi 0, %s20
    %s23 = sphi 0, %s21
    %s35 = sphi 0, %s37
    %s38 = sphi 0, %s35
    %s39 = sphi 0, %s38
    %s55 = sphi 0, %s39
    %s59 = sphi 0, %s59
    %s61 = sphi 0, %s59
    %s62 = sphi 0, %s61
    %s76 = sphi 0, %s62
    %s82 = sphi 0, %s84
    %s85 = sphi 0, %s82
    %s86 = sphi 0, %s85
    %s102 = sphi 0, %s86
    %s106 = sphi 0, %s106
    %s108 = sphi 0, %s106
    %s109 = sphi 0, %s108
    %s123 = sphi 0, %s109
    %s127 = sphi 0, %s127
    %s129 = sphi 0, %s127
    %s130 = sphi 0, %s129
    %s144 = sphi 0, %s130
    %s150 = sphi 0, %s152
    %s153 = sphi 0, %s150
    %s154 = sphi 0, %s153
    %s170 = sphi 0, %s154
  $region4: #{graphsage_forward.5} parent=0 // loop_header_branch
    %14 = sbr.rel (%p12) target = $region8
  $region5: #{graphsage_forward.5} parent=0 // loop_body
    %s16 = ssub.s32 %s11, 1
    %s17 = ssub.s32 %s11, 2
    %s24 = sadd.s32 1, %s19
    %p25 = scmp.ge.s32.totalorder %s24, 1
    %s26 = scalar_select %p25, 0, %s24
    %s27 = sadd.s32 1, %s18
    %s28 = scalar_select %p25, %s27, %s18
    %p29 = scmp.ge.s32.totalorder %s28, 2
    %s30 = scalar_select %p29, 0, %s28
    %s31 = ssub.s32 %s18, %s30
    %s32 = ssub.s32 %s19, %s26
    %s33 = sor.u32 %s31, %s32
    %p34 = scmp.eq.s32.totalorder %s33, 0
    %s36 = sadd.s32 %s35, 1
    %s37 = scalar_select %p34, %s35, %s36
    %p40 = pneg %p34
    %p41 = scmp.eq.s32.totalorder %s11, 1
    %p42 = por %p40, %p41
    %p43 = scmp.ne.s32.totalorder %s35, %s38
    %p44 = scmp.eq.s32.totalorder %s11, 0
    %p45 = por %p43, %p44
    %p46 = scmp.ne.s32.totalorder %s35, %s38
    %p47 = scmp.eq.s32.totalorder %s16, 1
    %p48 = por %p46, %p47
    %p49 = scmp.ne.s32.totalorder %s38, %s39
    %p50 = scmp.eq.s32.totalorder %s16, 0
    %p51 = por %p49, %p50
    %p52 = scmp.ne.s32.totalorder %s38, %s39
    %p53 = scmp.eq.s32.totalorder %s17, 1
    %p54 = por %p52, %p53
    %p56 = scmp.ne.s32.totalorder %s39, %s55
    %p57 = scmp.eq.s32.totalorder %s17, 0
    %p58 = por %p56, %p57
    %s60 = sadd.s32 %s59, 1
    %p63 = scmp.eq.s32.totalorder %s11, 1
    %p64 = scmp.ne.s32.totalorder %s59, %s61
    %p65 = scmp.eq.s32.totalorder %s11, 0
    %p66 = por %p64, %p65
    %p67 = scmp.ne.s32.totalorder %s59, %s61
    %p68 = scmp.eq.s32.totalorder %s16, 1
    %p69 = por %p67, %p68
    %p70 = scmp.ne.s32.totalorder %s61, %s62
    %p71 = scmp.eq.s32.totalorder %s16, 0
    %p72 = por %p70, %p71
    %p73 = scmp.ne.s32.totalorder %s61, %s62
    %p74 = scmp.eq.s32.totalorder %s17, 1
    %p75 = por %p73, %p74
    %p77 = scmp.ne.s32.totalorder %s62, %s76
    %p78 = scmp.eq.s32.totalorder %s17, 0
    %p79 = por %p77, %p78
    %s80 = ssub.s32 %s18, %s30
    %p81 = scmp.eq.s32.totalorder %s80, 0
    %s83 = sadd.s32 %s82, 1
    %s84 = scalar_select %p81, %s82, %s83
    %p87 = pneg %p81
    %p88 = scmp.eq.s32.totalorder %s11, 1
    %p89 = por %p87, %p88
    %p90 = scmp.ne.s32.totalorder %s82, %s85
    %p91 = scmp.eq.s32.totalorder %s11, 0
    %p92 = por %p90, %p91
    %p93 = scmp.ne.s32.totalorder %s82, %s85
    %p94 = scmp.eq.s32.totalorder %s16, 1
    %p95 = por %p93, %p94
    %p96 = scmp.ne.s32.totalorder %s85, %s86
    %p97 = scmp.eq.s32.totalorder %s16, 0
    %p98 = por %p96, %p97
    %p99 = scmp.ne.s32.totalorder %s85, %s86
    %p100 = scmp.eq.s32.totalorder %s17, 1
    %p101 = por %p99, %p100
    %p103 = scmp.ne.s32.totalorder %s86, %s102
    %p104 = scmp.eq.s32.totalorder %s17, 0
    %p105 = por %p103, %p104
    %s107 = sadd.s32 %s106, 1
    %p110 = scmp.eq.s32.totalorder %s11, 1
    %p111 = scmp.ne.s32.totalorder %s106, %s108
    %p112 = scmp.eq.s32.totalorder %s11, 0
    %p113 = por %p111, %p112
    %p114 = scmp.ne.s32.totalorder %s106, %s108
    %p115 = scmp.eq.s32.totalorder %s16, 1
    %p116 = por %p114, %p115
    %p117 = scmp.ne.s32.totalorder %s108, %s109
    %p118 = scmp.eq.s32.totalorder %s16, 0
    %p119 = por %p117, %p118
    %p120 = scmp.ne.s32.totalorder %s108, %s109
    %p121 = scmp.eq.s32.totalorder %s17, 1
    %p122 = por %p120, %p121
    %p124 = scmp.ne.s32.totalorder %s109, %s123
    %p125 = scmp.eq.s32.totalorder %s17, 0
    %p126 = por %p124, %p125
    %s128 = sadd.s32 %s127, 1
    %p131 = scmp.eq.s32.totalorder %s11, 1
    %p132 = scmp.ne.s32.totalorder %s127, %s129
    %p133 = scmp.eq.s32.totalorder %s11, 0
    %p134 = por %p132, %p133
    %p135 = scmp.ne.s32.totalorder %s127, %s129
    %p136 = scmp.eq.s32.totalorder %s16, 1
    %p137 = por %p135, %p136
    %p138 = scmp.ne.s32.totalorder %s129, %s130
    %p139 = scmp.eq.s32.totalorder %s16, 0
    %p140 = por %p138, %p139
    %p141 = scmp.ne.s32.totalorder %s129, %s130
    %p142 = scmp.eq.s32.totalorder %s17, 1
    %p143 = por %p141, %p142
    %p145 = scmp.ne.s32.totalorder %s130, %s144
    %p146 = scmp.eq.s32.totalorder %s17, 0
    %p147 = por %p145, %p146
    %s148 = ssub.s32 %s18, %s30
    %p149 = scmp.eq.s32.totalorder %s148, 0
    %s151 = sadd.s32 %s150, 1
    %s152 = scalar_select %p149, %s150, %s151
    %p155 = pneg %p149
    %p156 = scmp.eq.s32.totalorder %s11, 1
    %p157 = por %p155, %p156
    %p158 = scmp.ne.s32.totalorder %s150, %s153
    %p159 = scmp.eq.s32.totalorder %s11, 0
    %p160 = por %p158, %p159
    %p161 = scmp.ne.s32.totalorder %s150, %s153
    %p162 = scmp.eq.s32.totalorder %s16, 1
    %p163 = por %p161, %p162
    %p164 = scmp.ne.s32.totalorder %s153, %s154
    %p165 = scmp.eq.s32.totalorder %s16, 0
    %p166 = por %p164, %p165
    %p167 = scmp.ne.s32.totalorder %s153, %s154
    %p168 = scmp.eq.s32.totalorder %s17, 1
    %p169 = por %p167, %p168
    %p171 = scmp.ne.s32.totalorder %s154, %s170
    %p172 = scmp.eq.s32.totalorder %s17, 0
    %p173 = por %p171, %p172
    %p174 = scmp.le.s32.totalorder 1, %s11
    %p175 = scmp.lt.s32.totalorder %s11, 3
    %p176 = pnand %p174, %p175
    %p177 = pneg %p176
    // Predicated region
    $region9: #{graphsage_forward.5} parent=5 // pred_check
      _
    $region10: #{graphsage_forward.5} parent=5 // pred_check_branch
      %179 = sbr.rel (%p176) target = $region12
    $region11: #{graphsage_forward.5} parent=5 // pred_region
      %s180 = ssub.s32 %s11, 1
      // Predicated region
      $region13: #{graphsage_forward.5} parent=11 // pred_check
        %p181 = pneg %p72
      $region14: #{graphsage_forward.5} parent=11 // pred_check_branch
        %183 = sbr.rel (%p181) target = $region16
      $region15: #{graphsage_forward.5} parent=11 // pred_region
        _
      $region16: #{graphsage_forward.5} parent=11 // pred_fallthru
        _
      // Predicated region
      $region17: #{graphsage_forward.5} parent=11 // pred_check
        %p184 = pneg %p119
      $region18: #{graphsage_forward.5} parent=11 // pred_check_branch
        %186 = sbr.rel (%p184) target = $region20
      $region19: #{graphsage_forward.5} parent=11 // pred_region
        _
      $region20: #{graphsage_forward.5} parent=11 // pred_fallthru
        _
      // Predicated region
      $region21: #{graphsage_forward.5} parent=11 // pred_check
        %p187 = pneg %p140
      $region22: #{graphsage_forward.5} parent=11 // pred_check_branch
        %189 = sbr.rel (%p187) target = $region24
      $region23: #{graphsage_forward.5} parent=11 // pred_region
        _
      $region24: #{graphsage_forward.5} parent=11 // pred_fallthru
        _
    $region12: #{graphsage_forward.5} parent=5 // pred_fallthru
      _
    %p190 = scmp.lt.s32.totalorder %s11, 2
    // Predicated region
    $region25: #{graphsage_forward.5} parent=5 // pred_check
      %p191 = pneg %p190
    $region26: #{graphsage_forward.5} parent=5 // pred_check_branch
      %193 = sbr.rel (%p191) target = $region28
    $region27: #{graphsage_forward.5} parent=5 // pred_region
      // Predicated region
      $region29: #{graphsage_forward.5} parent=27 // pred_check
        %p194 = pneg %p45
      $region30: #{graphsage_forward.5} parent=27 // pred_check_branch
        %196 = sbr.rel (%p194) target = $region32
      $region31: #{graphsage_forward.5} parent=27 // pred_region
        %s197 = smul.u32 16, %s18
        %s198 = smul.u32 2, %s19
        %p199 = scmp.lt.s32.totalorder %s197, 31
        %s200 = scalar_select %p199, %s197, 31
        %p201 = scmp.lt.s32.totalorder %s198, 1
        %s202 = scalar_select %p201, %s198, 1
        %s203 = smul.addr %s200, 2
        %s204 = sadd.s32 %s202, %s203
        %s205 = smul.addr %s204, 4
        %s206 = scalar_lea.vmem %s0, %s205
        %s207 = smul.u32 16, %s18
        %s208 = smul.u32 2, %s19
      $region32: #{graphsage_forward.5} parent=27 // pred_fallthru
        _
      // Predicated region
      $region33: #{graphsage_forward.5} parent=27 // pred_check
        %p209 = pneg %p92
      $region34: #{graphsage_forward.5} parent=27 // pred_check_branch
        %211 = sbr.rel (%p209) target = $region36
      $region35: #{graphsage_forward.5} parent=27 // pred_region
        %s212 = smul.u32 16, %s18
        %p213 = scmp.lt.s32.totalorder %s212, 31
        %s214 = scalar_select %p213, %s212, 31
        %s215 = smul.addr %s214, 4
        %s216 = scalar_lea.vmem %s2, %s215
        %s217 = smul.u32 16, %s18
      $region36: #{graphsage_forward.5} parent=27 // pred_fallthru
        _
    $region28: #{graphsage_forward.5} parent=5 // pred_fallthru
      _
    %p218 = scmp.le.s32.totalorder 1, %s11
    %p219 = scmp.lt.s32.totalorder %s11, 3
    %p220 = pnand %p218, %p219
    %p221 = pneg %p220
    // Predicated region
    $region37: #{graphsage_forward.5} parent=5 // pred_check
      _
    $region38: #{graphsage_forward.5} parent=5 // pred_check_branch
      %223 = sbr.rel (%p220) target = $region40
    $region39: #{graphsage_forward.5} parent=5 // pred_region
      %s224 = ssub.s32 %s11, 1
      %s225 = smul.u32 16, %s20
      %s226 = smul.u32 2, %s21
      %p227 = scmp.lt.s32.totalorder %s225, 31
      %s228 = scalar_select %p227, %s225, 31
      %p229 = scmp.lt.s32.totalorder %s226, 1
      %s230 = scalar_select %p229, %s226, 1
      %s231 = smul.addr %s228, 2
      %s232 = sadd.s32 %s230, %s231
      %s233 = smul.addr %s232, 4
      %s234 = scalar_lea.vmem %s0, %s233
      %p235 = pneg %p51
      %p236 = pneg %p48
      %p237 = pneg %p72
      %p238 = pneg %p69
      %s239 = smul.u32 16, %s20
      %p240 = scmp.lt.s32.totalorder %s239, 31
      %s241 = scalar_select %p240, %s239, 31
      %s242 = smul.addr %s241, 4
      %s243 = scalar_lea.vmem %s2, %s242
      %p244 = pneg %p98
      %p245 = pneg %p95
      %p246 = pneg %p119
      %p247 = pneg %p116
      %p248 = pneg %p140
      %p249 = pneg %p137
      %p250 = pneg %p166
      %p251 = pneg %p163
      %s252 = smul.u32 16, %s20
      %p253 = scmp.lt.s32.totalorder %s252, 31
      %s254 = scalar_select %p253, %s252, 31
      %s255 = smul.addr %s254, 4
      %s256 = scalar_lea.vmem %s5, %s255
      %s257 = smul.u32 16, %s20
      %s258 = smul.u32 2, %s21
      %p259 = scmp.lt.s32.totalorder %s257, 31
      %s260 = scalar_select %p259, %s257, 31
      %p261 = scmp.lt.s32.totalorder %s258, 1
      %s262 = scalar_select %p261, %s258, 1
      %s263 = smul.addr %s260, 2
      %s264 = sadd.s32 %s262, %s263
      %s265 = smul.addr %s264, 4
      %s266 = scalar_lea.vmem %s0, %s265
      %s267 = smul.u32 16, %s20
      %s268 = smul.u32 2, %s21
      %s269 = smul.u32 16, %s20
      %p270 = scmp.lt.s32.totalorder %s269, 31
      %s271 = scalar_select %p270, %s269, 31
      %s272 = smul.addr %s271, 4
      %s273 = scalar_lea.vmem %s2, %s272
      %s274 = smul.u32 16, %s20
      %s275 = smul.u32 16, %s20
      %p276 = scmp.lt.s32.totalorder %s275, 31
      %s277 = scalar_select %p276, %s275, 31
      %s278 = smul.addr %s277, 4
      %s279 = scalar_lea.vmem %s5, %s278
      %s280 = smul.u32 16, %s20
      %p281 = scmp.eq.s32.totalorder %s21, 0
      // Predicated region
      $region41: #{graphsage_forward.5} parent=39 // pred_check
        %p282 = pneg %p281
      $region42: #{graphsage_forward.5} parent=39 // pred_check_branch
        %284 = sbr.rel (%p282) target = $region44
      $region43: #{graphsage_forward.5} parent=39 // pred_region
        %285 = vst [vmem:[#allocation2] sm:$0xff] 0.0
        %286 = vst [vmem:[#allocation2 + $0x8] sm:$0xff] 0.0
        %287 = vst [vmem:[#allocation2 + $0x10] sm:$0xff] 0.0
        %288 = vst [vmem:[#allocation2 + $0x18] sm:$0xff] 0.0
        %289 = vst [vmem:[#allocation2 + $0x20] sm:$0xff] 0.0
        %290 = vst [vmem:[#allocation2 + $0x28] sm:$0xff] 0.0
        %291 = vst [vmem:[#allocation2 + $0x30] sm:$0xff] 0.0
        %292 = vst [vmem:[#allocation2 + $0x38] sm:$0xff] 0.0
        %293 = vst [vmem:[#allocation2 + $0x40] sm:$0xff] 0.0
        %294 = vst [vmem:[#allocation2 + $0x48] sm:$0xff] 0.0
        %295 = vst [vmem:[#allocation2 + $0x50] sm:$0xff] 0.0
        %296 = vst [vmem:[#allocation2 + $0x58] sm:$0xff] 0.0
        %297 = vst [vmem:[#allocation2 + $0x60] sm:$0xff] 0.0
        %298 = vst [vmem:[#allocation2 + $0x68] sm:$0xff] 0.0
        %299 = vst [vmem:[#allocation2 + $0x70] sm:$0xff] 0.0
        %300 = vst [vmem:[#allocation2 + $0x78] sm:$0xff] 0.0
      $region44: #{graphsage_forward.5} parent=39 // pred_fallthru
        _
      %s301 = smul.u32 %s21, 256
      %s302 = sshra.s32 %s301, 3
      %s303 = sand.u32 %s301, 7
      %s304 = smul.addr %s302, 4
      %s305 = scalar_lea.vmem %s1, %s304
      %v306 = vld [vmem:[%s305] sm:$0xf]
      %v307 = vld [vmem:[%s305 + $0x4] sm:$0xf]
      %v308 = vld [vmem:[%s305 + $0x8] sm:$0xf]
      %v309 = vld [vmem:[%s305 + $0xc] sm:$0xf]
      %v310 = vld [vmem:[%s305 + $0x10] sm:$0xf]
      %v311 = vld [vmem:[%s305 + $0x14] sm:$0xf]
      %v312 = vld [vmem:[%s305 + $0x18] sm:$0xf]
      %v313 = vld [vmem:[%s305 + $0x1c] sm:$0xf]
      %v314 = vld [vmem:[%s305 + $0x20] sm:$0xf]
      %v315 = vld [vmem:[%s305 + $0x24] sm:$0xf]
      %v316 = vld [vmem:[%s305 + $0x28] sm:$0xf]
      %v317 = vld [vmem:[%s305 + $0x2c] sm:$0xf]
      %v318 = vld [vmem:[%s305 + $0x30] sm:$0xf]
      %v319 = vld [vmem:[%s305 + $0x34] sm:$0xf]
      %v320 = vld [vmem:[%s305 + $0x38] sm:$0xf]
      %v321 = vld [vmem:[%s305 + $0x3c] sm:$0xf]
      %v322 = vld [vmem:[%s305 + $0x40] sm:$0xf]
      %v323 = vld [vmem:[%s305 + $0x44] sm:$0xf]
      %v324 = vld [vmem:[%s305 + $0x48] sm:$0xf]
      %v325 = vld [vmem:[%s305 + $0x4c] sm:$0xf]
      %v326 = vld [vmem:[%s305 + $0x50] sm:$0xf]
      %v327 = vld [vmem:[%s305 + $0x54] sm:$0xf]
      %v328 = vld [vmem:[%s305 + $0x58] sm:$0xf]
      %v329 = vld [vmem:[%s305 + $0x5c] sm:$0xf]
      %v330 = vld [vmem:[%s305 + $0x60] sm:$0xf]
      %v331 = vld [vmem:[%s305 + $0x64] sm:$0xf]
      %v332 = vld [vmem:[%s305 + $0x68] sm:$0xf]
      %v333 = vld [vmem:[%s305 + $0x6c] sm:$0xf]
      %v334 = vld [vmem:[%s305 + $0x70] sm:$0xf]
      %v335 = vld [vmem:[%s305 + $0x74] sm:$0xf]
      %v336 = vld [vmem:[%s305 + $0x78] sm:$0xf]
      %v337 = vld [vmem:[%s305 + $0x7c] sm:$0xf]
      %v338 = vld [vmem:[#allocation2] sm:$0xff]
      %v339 = vld [vmem:[#allocation2 + $0x8] sm:$0xff]
      %v340 = vld [vmem:[#allocation2 + $0x10] sm:$0xff]
      %v341 = vld [vmem:[#allocation2 + $0x18] sm:$0xff]
      %v342 = vld [vmem:[#allocation2 + $0x20] sm:$0xff]
      %v343 = vld [vmem:[#allocation2 + $0x28] sm:$0xff]
      %v344 = vld [vmem:[#allocation2 + $0x30] sm:$0xff]
      %v345 = vld [vmem:[#allocation2 + $0x38] sm:$0xff]
      %v346 = vld [vmem:[#allocation2 + $0x40] sm:$0xff]
      %v347 = vld [vmem:[#allocation2 + $0x48] sm:$0xff]
      %v348 = vld [vmem:[#allocation2 + $0x50] sm:$0xff]
      %v349 = vld [vmem:[#allocation2 + $0x58] sm:$0xff]
      %v350 = vld [vmem:[#allocation2 + $0x60] sm:$0xff]
      %v351 = vld [vmem:[#allocation2 + $0x68] sm:$0xff]
      %v352 = vld [vmem:[#allocation2 + $0x70] sm:$0xff]
      %v353 = vld [vmem:[#allocation2 + $0x78] sm:$0xff]
      %v354 = vld [vmem:[%s266] sm:$0xff]
      %v355 = vld [vmem:[%s266 + $0x8] sm:$0xff]
      %v356 = vld [vmem:[%s266 + $0x10] sm:$0xff]
      %v357 = vld [vmem:[%s266 + $0x18] sm:$0xff]
      %v358 = vld [vmem:[%s266 + $0x20] sm:$0xff]
      %v359 = vld [vmem:[%s266 + $0x28] sm:$0xff]
      %v360 = vld [vmem:[%s266 + $0x30] sm:$0xff]
      %v361 = vld [vmem:[%s266 + $0x38] sm:$0xff]
      %v362 = vld [vmem:[%s266 + $0x40] sm:$0xff]
      %v363 = vld [vmem:[%s266 + $0x48] sm:$0xff]
      %v364 = vld [vmem:[%s266 + $0x50] sm:$0xff]
      %v365 = vld [vmem:[%s266 + $0x58] sm:$0xff]
      %v366 = vld [vmem:[%s266 + $0x60] sm:$0xff]
      %v367 = vld [vmem:[%s266 + $0x68] sm:$0xff]
      %v368 = vld [vmem:[%s266 + $0x70] sm:$0xff]
      %v369 = vld [vmem:[%s266 + $0x78] sm:$0xff]
      %v386 = vunpack.c.l.b16 %v354
      %v387 = vunpack.c.h.b16 %v354
      %v388 = vunpack.c.l.b16 %v355
      %v389 = vunpack.c.h.b16 %v355
      %v390 = vunpack.c.l.b16 %v356
      %v391 = vunpack.c.h.b16 %v356
      %v392 = vunpack.c.l.b16 %v357
      %v393 = vunpack.c.h.b16 %v357
      %v394 = vunpack.c.l.b16 %v358
      %v395 = vunpack.c.h.b16 %v358
      %v396 = vunpack.c.l.b16 %v359
      %v397 = vunpack.c.h.b16 %v359
      %v398 = vunpack.c.l.b16 %v360
      %v399 = vunpack.c.h.b16 %v360
      %v400 = vunpack.c.l.b16 %v361
      %v401 = vunpack.c.h.b16 %v361
      %v402 = vunpack.c.l.b16 %v362
      %v403 = vunpack.c.h.b16 %v362
      %v404 = vunpack.c.l.b16 %v363
      %v405 = vunpack.c.h.b16 %v363
      %v406 = vunpack.c.l.b16 %v364
      %v407 = vunpack.c.h.b16 %v364
      %v408 = vunpack.c.l.b16 %v365
      %v409 = vunpack.c.h.b16 %v365
      %v410 = vunpack.c.l.b16 %v366
      %v411 = vunpack.c.h.b16 %v366
      %v412 = vunpack.c.l.b16 %v367
      %v413 = vunpack.c.h.b16 %v367
      %v414 = vunpack.c.l.b16 %v368
      %v415 = vunpack.c.h.b16 %v368
      %v416 = vunpack.c.l.b16 %v369
      %v417 = vunpack.c.h.b16 %v369
      %v418 = vpack.c.b16 %v388, %v386
      %v419 = vpack.c.b16 %v389, %v387
      %v420 = vpack.c.b16 %v392, %v390
      %v421 = vpack.c.b16 %v393, %v391
      %v422 = vpack.c.b16 %v396, %v394
      %v423 = vpack.c.b16 %v397, %v395
      %v424 = vpack.c.b16 %v400, %v398
      %v425 = vpack.c.b16 %v401, %v399
      %v426 = vpack.c.b16 %v404, %v402
      %v427 = vpack.c.b16 %v405, %v403
      %v428 = vpack.c.b16 %v408, %v406
      %v429 = vpack.c.b16 %v409, %v407
      %v430 = vpack.c.b16 %v412, %v410
      %v431 = vpack.c.b16 %v413, %v411
      %v432 = vpack.c.b16 %v416, %v414
      %v433 = vpack.c.b16 %v417, %v415
      %v482 = vunpack.c.l.b16 %v306
      %v483 = vunpack.c.l.b16 %v307
      %v484 = vunpack.c.l.b16 %v308
      %v485 = vunpack.c.l.b16 %v309
      %v486 = vunpack.c.l.b16 %v310
      %v487 = vunpack.c.l.b16 %v311
      %v488 = vunpack.c.l.b16 %v312
      %v489 = vunpack.c.l.b16 %v313
      %v490 = vunpack.c.l.b16 %v314
      %v491 = vunpack.c.l.b16 %v315
      %v492 = vunpack.c.l.b16 %v316
      %v493 = vunpack.c.l.b16 %v317
      %v494 = vunpack.c.l.b16 %v318
      %v495 = vunpack.c.l.b16 %v319
      %v496 = vunpack.c.l.b16 %v320
      %v497 = vunpack.c.l.b16 %v321
      %v498 = vunpack.c.l.b16 %v322
      %v499 = vunpack.c.l.b16 %v323
      %v500 = vunpack.c.l.b16 %v324
      %v501 = vunpack.c.l.b16 %v325
      %v502 = vunpack.c.l.b16 %v326
      %v503 = vunpack.c.l.b16 %v327
      %v504 = vunpack.c.l.b16 %v328
      %v505 = vunpack.c.l.b16 %v329
      %v506 = vunpack.c.l.b16 %v330
      %v507 = vunpack.c.l.b16 %v331
      %v508 = vunpack.c.l.b16 %v332
      %v509 = vunpack.c.l.b16 %v333
      %v510 = vunpack.c.l.b16 %v334
      %v511 = vunpack.c.l.b16 %v335
      %v512 = vunpack.c.l.b16 %v336
      %v513 = vunpack.c.l.b16 %v337
      %v514 = vpack.c.b16 %v483, %v482
      %v515 = vpack.c.b16 %v485, %v484
      %v516 = vpack.c.b16 %v487, %v486
      %v517 = vpack.c.b16 %v489, %v488
      %v518 = vpack.c.b16 %v491, %v490
      %v519 = vpack.c.b16 %v493, %v492
      %v520 = vpack.c.b16 %v495, %v494
      %v521 = vpack.c.b16 %v497, %v496
      %v522 = vpack.c.b16 %v499, %v498
      %v523 = vpack.c.b16 %v501, %v500
      %v524 = vpack.c.b16 %v503, %v502
      %v525 = vpack.c.b16 %v505, %v504
      %v526 = vpack.c.b16 %v507, %v506
      %v527 = vpack.c.b16 %v509, %v508
      %v528 = vpack.c.b16 %v511, %v510
      %v529 = vpack.c.b16 %v513, %v512
      %546 = vmatpush.bf16.msra.mxu0 %v521
      %547 = vmatpush.bf16.msra.mxu0 %v520
      %548 = vmatpush.bf16.msra.mxu0 %v519
      %549 = vmatpush.bf16.msra.mxu0 %v518
      %550 = vmatpush.bf16.msra.mxu0 %v517
      %551 = vmatpush.bf16.msra.mxu0 %v516
      %552 = vmatpush.bf16.msra.mxu0 %v515
      %553 = vmatpush.bf16.msra.mxu0 %v514
      %554 = vmatmul.bf16.gmra.mxu0 %v418
      %v555 = vpop.f32.mrf.mxu0
      %v556 = vadd.f32 0.0, %v555
      %v557 = vpop.f32.mrf.mxu0
      %v558 = vadd.f32 0.0, %v557
      %559 = vmatmul.bf16.gmra.mxu0 %v420
      %v560 = vpop.f32.mrf.mxu0
      %v561 = vadd.f32 0.0, %v560
      %v562 = vpop.f32.mrf.mxu0
      %v563 = vadd.f32 0.0, %v562
      %564 = vmatmul.bf16.gmra.mxu0 %v422
      %v565 = vpop.f32.mrf.mxu0
      %v566 = vadd.f32 0.0, %v565
      %v567 = vpop.f32.mrf.mxu0
      %v568 = vadd.f32 0.0, %v567
      %569 = vmatmul.bf16.gmra.mxu0 %v424
      %v570 = vpop.f32.mrf.mxu0
      %v571 = vadd.f32 0.0, %v570
      %v572 = vpop.f32.mrf.mxu0
      %v573 = vadd.f32 0.0, %v572
      %574 = vmatmul.bf16.gmra.mxu0 %v426
      %v575 = vpop.f32.mrf.mxu0
      %v576 = vadd.f32 0.0, %v575
      %v577 = vpop.f32.mrf.mxu0
      %v578 = vadd.f32 0.0, %v577
      %579 = vmatmul.bf16.gmra.mxu0 %v428
      %v580 = vpop.f32.mrf.mxu0
      %v581 = vadd.f32 0.0, %v580
      %v582 = vpop.f32.mrf.mxu0
      %v583 = vadd.f32 0.0, %v582
      %584 = vmatmul.bf16.gmra.mxu0 %v430
      %v585 = vpop.f32.mrf.mxu0
      %v586 = vadd.f32 0.0, %v585
      %v587 = vpop.f32.mrf.mxu0
      %v588 = vadd.f32 0.0, %v587
      %589 = vmatmul.bf16.gmra.mxu0 %v432
      %v590 = vpop.f32.mrf.mxu0
      %v591 = vadd.f32 0.0, %v590
      %v592 = vpop.f32.mrf.mxu0
      %v593 = vadd.f32 0.0, %v592
      %594 = vdwg.mxu0
      %595 = vmatpush.bf16.msra.mxu0 %v529
      %596 = vmatpush.bf16.msra.mxu0 %v528
      %597 = vmatpush.bf16.msra.mxu0 %v527
      %598 = vmatpush.bf16.msra.mxu0 %v526
      %599 = vmatpush.bf16.msra.mxu0 %v525
      %600 = vmatpush.bf16.msra.mxu0 %v524
      %601 = vmatpush.bf16.msra.mxu0 %v523
      %602 = vmatpush.bf16.msra.mxu0 %v522
      %603 = vmatmul.bf16.gmra.mxu0 %v419
      %v604 = vpop.f32.mrf.mxu0
      %v605 = vadd.f32 %v556, %v604
      %v606 = vpop.f32.mrf.mxu0
      %v607 = vadd.f32 %v558, %v606
      %608 = vmatmul.bf16.gmra.mxu0 %v421
      %v609 = vpop.f32.mrf.mxu0
      %v610 = vadd.f32 %v561, %v609
      %v611 = vpop.f32.mrf.mxu0
      %v612 = vadd.f32 %v563, %v611
      %613 = vmatmul.bf16.gmra.mxu0 %v423
      %v614 = vpop.f32.mrf.mxu0
      %v615 = vadd.f32 %v566, %v614
      %v616 = vpop.f32.mrf.mxu0
      %v617 = vadd.f32 %v568, %v616
      %618 = vmatmul.bf16.gmra.mxu0 %v425
      %v619 = vpop.f32.mrf.mxu0
      %v620 = vadd.f32 %v571, %v619
      %v621 = vpop.f32.mrf.mxu0
      %v622 = vadd.f32 %v573, %v621
      %623 = vmatmul.bf16.gmra.mxu0 %v427
      %v624 = vpop.f32.mrf.mxu0
      %v625 = vadd.f32 %v576, %v624
      %v626 = vpop.f32.mrf.mxu0
      %v627 = vadd.f32 %v578, %v626
      %628 = vmatmul.bf16.gmra.mxu0 %v429
      %v629 = vpop.f32.mrf.mxu0
      %v630 = vadd.f32 %v581, %v629
      %v631 = vpop.f32.mrf.mxu0
      %v632 = vadd.f32 %v583, %v631
      %633 = vmatmul.bf16.gmra.mxu0 %v431
      %v634 = vpop.f32.mrf.mxu0
      %v635 = vadd.f32 %v586, %v634
      %v636 = vpop.f32.mrf.mxu0
      %v637 = vadd.f32 %v588, %v636
      %638 = vmatmul.bf16.gmra.mxu0 %v433
      %v639 = vpop.f32.mrf.mxu0
      %v640 = vadd.f32 %v591, %v639
      %v641 = vpop.f32.mrf.mxu0
      %v642 = vadd.f32 %v593, %v641
      %643 = vdwg.mxu0
      %v644 = vadd.f32 %v338, %v605
      %v645 = vadd.f32 %v339, %v607
      %v646 = vadd.f32 %v340, %v610
      %v647 = vadd.f32 %v341, %v612
      %v648 = vadd.f32 %v342, %v615
      %v649 = vadd.f32 %v343, %v617
      %v650 = vadd.f32 %v344, %v620
      %v651 = vadd.f32 %v345, %v622
      %v652 = vadd.f32 %v346, %v625
      %v653 = vadd.f32 %v347, %v627
      %v654 = vadd.f32 %v348, %v630
      %v655 = vadd.f32 %v349, %v632
      %v656 = vadd.f32 %v350, %v635
      %v657 = vadd.f32 %v351, %v637
      %v658 = vadd.f32 %v352, %v640
      %v659 = vadd.f32 %v353, %v642
      %660 = vst [vmem:[#allocation2] sm:$0xff] %v644
      %661 = vst [vmem:[#allocation2 + $0x8] sm:$0xff] %v645
      %662 = vst [vmem:[#allocation2 + $0x10] sm:$0xff] %v646
      %663 = vst [vmem:[#allocation2 + $0x18] sm:$0xff] %v647
      %664 = vst [vmem:[#allocation2 + $0x20] sm:$0xff] %v648
      %665 = vst [vmem:[#allocation2 + $0x28] sm:$0xff] %v649
      %666 = vst [vmem:[#allocation2 + $0x30] sm:$0xff] %v650
      %667 = vst [vmem:[#allocation2 + $0x38] sm:$0xff] %v651
      %668 = vst [vmem:[#allocation2 + $0x40] sm:$0xff] %v652
      %669 = vst [vmem:[#allocation2 + $0x48] sm:$0xff] %v653
      %670 = vst [vmem:[#allocation2 + $0x50] sm:$0xff] %v654
      %671 = vst [vmem:[#allocation2 + $0x58] sm:$0xff] %v655
      %672 = vst [vmem:[#allocation2 + $0x60] sm:$0xff] %v656
      %673 = vst [vmem:[#allocation2 + $0x68] sm:$0xff] %v657
      %674 = vst [vmem:[#allocation2 + $0x70] sm:$0xff] %v658
      %675 = vst [vmem:[#allocation2 + $0x78] sm:$0xff] %v659
      // Predicated region
      $region45: #{graphsage_forward.5} parent=39 // pred_check
        %p676 = pneg %p281
      $region46: #{graphsage_forward.5} parent=39 // pred_check_branch
        %678 = sbr.rel (%p676) target = $region48
      $region47: #{graphsage_forward.5} parent=39 // pred_region
        %v679 = vld [vmem:[#allocation2] sm:$0xff]
        %v680 = vld [vmem:[#allocation2 + $0x8] sm:$0xff]
        %v681 = vld [vmem:[#allocation2 + $0x10] sm:$0xff]
        %v682 = vld [vmem:[#allocation2 + $0x18] sm:$0xff]
        %v683 = vld [vmem:[#allocation2 + $0x20] sm:$0xff]
        %v684 = vld [vmem:[#allocation2 + $0x28] sm:$0xff]
        %v685 = vld [vmem:[#allocation2 + $0x30] sm:$0xff]
        %v686 = vld [vmem:[#allocation2 + $0x38] sm:$0xff]
        %v687 = vld [vmem:[#allocation2 + $0x40] sm:$0xff]
        %v688 = vld [vmem:[#allocation2 + $0x48] sm:$0xff]
        %v689 = vld [vmem:[#allocation2 + $0x50] sm:$0xff]
        %v690 = vld [vmem:[#allocation2 + $0x58] sm:$0xff]
        %v691 = vld [vmem:[#allocation2 + $0x60] sm:$0xff]
        %v692 = vld [vmem:[#allocation2 + $0x68] sm:$0xff]
        %v693 = vld [vmem:[#allocation2 + $0x70] sm:$0xff]
        %v694 = vld [vmem:[#allocation2 + $0x78] sm:$0xff]
        %v695 = vld [vmem:[%s273] sm:$0xf]
        %v696 = vld [vmem:[%s273 + $0x4] sm:$0xf]
        %v697 = vld [vmem:[%s273 + $0x8] sm:$0xf]
        %v698 = vld [vmem:[%s273 + $0xc] sm:$0xf]
        %v699 = vld [vmem:[%s273 + $0x10] sm:$0xf]
        %v700 = vld [vmem:[%s273 + $0x14] sm:$0xf]
        %v701 = vld [vmem:[%s273 + $0x18] sm:$0xf]
        %v702 = vld [vmem:[%s273 + $0x1c] sm:$0xf]
        %v703 = vld [vmem:[%s273 + $0x20] sm:$0xf]
        %v704 = vld [vmem:[%s273 + $0x24] sm:$0xf]
        %v705 = vld [vmem:[%s273 + $0x28] sm:$0xf]
        %v706 = vld [vmem:[%s273 + $0x2c] sm:$0xf]
        %v707 = vld [vmem:[%s273 + $0x30] sm:$0xf]
        %v708 = vld [vmem:[%s273 + $0x34] sm:$0xf]
        %v709 = vld [vmem:[%s273 + $0x38] sm:$0xf]
        %v710 = vld [vmem:[%s273 + $0x3c] sm:$0xf]
        %v711 = vld [vmem:[%s3] sm:$0xf]
        %v712 = vld [vmem:[%s3 + $0x4] sm:$0xf]
        %v713 = vld [vmem:[%s3 + $0x8] sm:$0xf]
        %v714 = vld [vmem:[%s3 + $0xc] sm:$0xf]
        %v715 = vld [vmem:[%s3 + $0x10] sm:$0xf]
        %v716 = vld [vmem:[%s3 + $0x14] sm:$0xf]
        %v717 = vld [vmem:[%s3 + $0x18] sm:$0xf]
        %v718 = vld [vmem:[%s3 + $0x1c] sm:$0xf]
        %v719 = vld [vmem:[%s3 + $0x20] sm:$0xf]
        %v720 = vld [vmem:[%s3 + $0x24] sm:$0xf]
        %v721 = vld [vmem:[%s3 + $0x28] sm:$0xf]
        %v722 = vld [vmem:[%s3 + $0x2c] sm:$0xf]
        %v723 = vld [vmem:[%s3 + $0x30] sm:$0xf]
        %v724 = vld [vmem:[%s3 + $0x34] sm:$0xf]
        %v725 = vld [vmem:[%s3 + $0x38] sm:$0xf]
        %v726 = vld [vmem:[%s3 + $0x3c] sm:$0xf]
        %v743 = vunpack.c.l.b16 %v695
        %v744 = vunpack.c.l.b16 %v696
        %v745 = vunpack.c.l.b16 %v697
        %v746 = vunpack.c.l.b16 %v698
        %v747 = vunpack.c.l.b16 %v699
        %v748 = vunpack.c.l.b16 %v700
        %v749 = vunpack.c.l.b16 %v701
        %v750 = vunpack.c.l.b16 %v702
        %v751 = vunpack.c.l.b16 %v703
        %v752 = vunpack.c.l.b16 %v704
        %v753 = vunpack.c.l.b16 %v705
        %v754 = vunpack.c.l.b16 %v706
        %v755 = vunpack.c.l.b16 %v707
        %v756 = vunpack.c.l.b16 %v708
        %v757 = vunpack.c.l.b16 %v709
        %v758 = vunpack.c.l.b16 %v710
        %v759 = vpack.c.b16 %v744, %v743
        %v760 = vpack.c.b16 %v746, %v745
        %v761 = vpack.c.b16 %v748, %v747
        %v762 = vpack.c.b16 %v750, %v749
        %v763 = vpack.c.b16 %v752, %v751
        %v764 = vpack.c.b16 %v754, %v753
        %v765 = vpack.c.b16 %v756, %v755
        %v766 = vpack.c.b16 %v758, %v757
        %v791 = vunpack.c.l.b16 %v711
        %v792 = vunpack.c.l.b16 %v712
        %v793 = vunpack.c.l.b16 %v713
        %v794 = vunpack.c.l.b16 %v714
        %v795 = vunpack.c.l.b16 %v715
        %v796 = vunpack.c.l.b16 %v716
        %v797 = vunpack.c.l.b16 %v717
        %v798 = vunpack.c.l.b16 %v718
        %v799 = vunpack.c.l.b16 %v719
        %v800 = vunpack.c.l.b16 %v720
        %v801 = vunpack.c.l.b16 %v721
        %v802 = vunpack.c.l.b16 %v722
        %v803 = vunpack.c.l.b16 %v723
        %v804 = vunpack.c.l.b16 %v724
        %v805 = vunpack.c.l.b16 %v725
        %v806 = vunpack.c.l.b16 %v726
        %v807 = vpack.c.b16 %v792, %v791
        %v808 = vpack.c.b16 %v794, %v793
        %v809 = vpack.c.b16 %v796, %v795
        %v810 = vpack.c.b16 %v798, %v797
        %v811 = vpack.c.b16 %v800, %v799
        %v812 = vpack.c.b16 %v802, %v801
        %v813 = vpack.c.b16 %v804, %v803
        %v814 = vpack.c.b16 %v806, %v805
        %823 = vmatpush.bf16.msra.mxu0 %v814
        %824 = vmatpush.bf16.msra.mxu0 %v813
        %825 = vmatpush.bf16.msra.mxu0 %v812
        %826 = vmatpush.bf16.msra.mxu0 %v811
        %827 = vmatpush.bf16.msra.mxu0 %v810
        %828 = vmatpush.bf16.msra.mxu0 %v809
        %829 = vmatpush.bf16.msra.mxu0 %v808
        %830 = vmatpush.bf16.msra.mxu0 %v807
        %831 = vmatmul.bf16.gmra.mxu0 %v759
        %v832 = vpop.f32.mrf.mxu0
        %v833 = vadd.f32 0.0, %v832
        %v834 = vpop.f32.mrf.mxu0
        %v835 = vadd.f32 0.0, %v834
        %836 = vmatmul.bf16.gmra.mxu0 %v760
        %v837 = vpop.f32.mrf.mxu0
        %v838 = vadd.f32 0.0, %v837
        %v839 = vpop.f32.mrf.mxu0
        %v840 = vadd.f32 0.0, %v839
        %841 = vmatmul.bf16.gmra.mxu0 %v761
        %v842 = vpop.f32.mrf.mxu0
        %v843 = vadd.f32 0.0, %v842
        %v844 = vpop.f32.mrf.mxu0
        %v845 = vadd.f32 0.0, %v844
        %846 = vmatmul.bf16.gmra.mxu0 %v762
        %v847 = vpop.f32.mrf.mxu0
        %v848 = vadd.f32 0.0, %v847
        %v849 = vpop.f32.mrf.mxu0
        %v850 = vadd.f32 0.0, %v849
        %851 = vmatmul.bf16.gmra.mxu0 %v763
        %v852 = vpop.f32.mrf.mxu0
        %v853 = vadd.f32 0.0, %v852
        %v854 = vpop.f32.mrf.mxu0
        %v855 = vadd.f32 0.0, %v854
        %856 = vmatmul.bf16.gmra.mxu0 %v764
        %v857 = vpop.f32.mrf.mxu0
        %v858 = vadd.f32 0.0, %v857
        %v859 = vpop.f32.mrf.mxu0
        %v860 = vadd.f32 0.0, %v859
        %861 = vmatmul.bf16.gmra.mxu0 %v765
        %v862 = vpop.f32.mrf.mxu0
        %v863 = vadd.f32 0.0, %v862
        %v864 = vpop.f32.mrf.mxu0
        %v865 = vadd.f32 0.0, %v864
        %866 = vmatmul.bf16.gmra.mxu0 %v766
        %v867 = vpop.f32.mrf.mxu0
        %v868 = vadd.f32 0.0, %v867
        %v869 = vpop.f32.mrf.mxu0
        %v870 = vadd.f32 0.0, %v869
        %871 = vdwg.mxu0
        %v872 = vadd.f32 %v679, %v833
        %v873 = vadd.f32 %v680, %v835
        %v874 = vadd.f32 %v681, %v838
        %v875 = vadd.f32 %v682, %v840
        %v876 = vadd.f32 %v683, %v843
        %v877 = vadd.f32 %v684, %v845
        %v878 = vadd.f32 %v685, %v848
        %v879 = vadd.f32 %v686, %v850
        %v880 = vadd.f32 %v687, %v853
        %v881 = vadd.f32 %v688, %v855
        %v882 = vadd.f32 %v689, %v858
        %v883 = vadd.f32 %v690, %v860
        %v884 = vadd.f32 %v691, %v863
        %v885 = vadd.f32 %v692, %v865
        %v886 = vadd.f32 %v693, %v868
        %v887 = vadd.f32 %v694, %v870
        %v888 = vld [vmem:[%s4] sm:$0x1]
        %v890 = vperm.slane %v888, 0
        %v892 = vadd.f32 %v872, %v890
        %v893 = vadd.f32 %v873, %v890
        %v894 = vadd.f32 %v874, %v890
        %v895 = vadd.f32 %v875, %v890
        %v896 = vadd.f32 %v876, %v890
        %v897 = vadd.f32 %v877, %v890
        %v898 = vadd.f32 %v878, %v890
        %v899 = vadd.f32 %v879, %v890
        %v900 = vadd.f32 %v880, %v890
        %v901 = vadd.f32 %v881, %v890
        %v902 = vadd.f32 %v882, %v890
        %v903 = vadd.f32 %v883, %v890
        %v904 = vadd.f32 %v884, %v890
        %v905 = vadd.f32 %v885, %v890
        %v906 = vadd.f32 %v886, %v890
        %v907 = vadd.f32 %v887, %v890
        %v908 = vmax.f32 %v892, 0.0
        %v909 = vmax.f32 %v893, 0.0
        %v910 = vmax.f32 %v894, 0.0
        %v911 = vmax.f32 %v895, 0.0
        %v912 = vmax.f32 %v896, 0.0
        %v913 = vmax.f32 %v897, 0.0
        %v914 = vmax.f32 %v898, 0.0
        %v915 = vmax.f32 %v899, 0.0
        %v916 = vmax.f32 %v900, 0.0
        %v917 = vmax.f32 %v901, 0.0
        %v918 = vmax.f32 %v902, 0.0
        %v919 = vmax.f32 %v903, 0.0
        %v920 = vmax.f32 %v904, 0.0
        %v921 = vmax.f32 %v905, 0.0
        %v922 = vmax.f32 %v906, 0.0
        %v923 = vmax.f32 %v907, 0.0
        %v924 = vpack.c.bf16 %v908, %v908
        %v925 = vpack.c.bf16 %v909, %v909
        %v926 = vpack.c.bf16 %v910, %v910
        %v927 = vpack.c.bf16 %v911, %v911
        %v928 = vpack.c.bf16 %v912, %v912
        %v929 = vpack.c.bf16 %v913, %v913
        %v930 = vpack.c.bf16 %v914, %v914
        %v931 = vpack.c.bf16 %v915, %v915
        %v932 = vpack.c.bf16 %v916, %v916
        %v933 = vpack.c.bf16 %v917, %v917
        %v934 = vpack.c.bf16 %v918, %v918
        %v935 = vpack.c.bf16 %v919, %v919
        %v936 = vpack.c.bf16 %v920, %v920
        %v937 = vpack.c.bf16 %v921, %v921
        %v938 = vpack.c.bf16 %v922, %v922
        %v939 = vpack.c.bf16 %v923, %v923
        %940 = vst [vmem:[%s279] sm:$0xf] %v924
        %941 = vst [vmem:[%s279 + $0x4] sm:$0xf] %v925
        %942 = vst [vmem:[%s279 + $0x8] sm:$0xf] %v926
        %943 = vst [vmem:[%s279 + $0xc] sm:$0xf] %v927
        %944 = vst [vmem:[%s279 + $0x10] sm:$0xf] %v928
        %945 = vst [vmem:[%s279 + $0x14] sm:$0xf] %v929
        %946 = vst [vmem:[%s279 + $0x18] sm:$0xf] %v930
        %947 = vst [vmem:[%s279 + $0x1c] sm:$0xf] %v931
        %948 = vst [vmem:[%s279 + $0x20] sm:$0xf] %v932
        %949 = vst [vmem:[%s279 + $0x24] sm:$0xf] %v933
        %950 = vst [vmem:[%s279 + $0x28] sm:$0xf] %v934
        %951 = vst [vmem:[%s279 + $0x2c] sm:$0xf] %v935
        %952 = vst [vmem:[%s279 + $0x30] sm:$0xf] %v936
        %953 = vst [vmem:[%s279 + $0x34] sm:$0xf] %v937
        %954 = vst [vmem:[%s279 + $0x38] sm:$0xf] %v938
        %955 = vst [vmem:[%s279 + $0x3c] sm:$0xf] %v939
      $region48: #{graphsage_forward.5} parent=39 // pred_fallthru
        _
      %s956 = smul.u32 16, %s20
      %p957 = scmp.lt.s32.totalorder %s956, 31
      %s958 = scalar_select %p957, %s956, 31
      %s959 = smul.addr %s958, 4
      %s960 = scalar_lea.vmem %s5, %s959
      // Predicated region
      $region49: #{graphsage_forward.5} parent=39 // pred_check
        %p961 = pneg %p163
      $region50: #{graphsage_forward.5} parent=39 // pred_check_branch
        %963 = sbr.rel (%p961) target = $region52
      $region51: #{graphsage_forward.5} parent=39 // pred_region
        %s964 = smul.u32 16, %s20
      $region52: #{graphsage_forward.5} parent=39 // pred_fallthru
        _
    $region40: #{graphsage_forward.5} parent=5 // pred_fallthru
      _
    %p965 = scmp.le.s32.totalorder 2, %s11
    // Predicated region
    $region53: #{graphsage_forward.5} parent=5 // pred_check
      %p966 = pneg %p965
    $region54: #{graphsage_forward.5} parent=5 // pred_check_branch
      %968 = sbr.rel (%p966) target = $region56
    $region55: #{graphsage_forward.5} parent=5 // pred_region
      %s969 = ssub.s32 %s11, 2
      // Predicated region
      $region57: #{graphsage_forward.5} parent=55 // pred_check
        %p970 = pneg %p169
      $region58: #{graphsage_forward.5} parent=55 // pred_check_branch
        %972 = sbr.rel (%p970) target = $region60
      $region59: #{graphsage_forward.5} parent=55 // pred_region
        %s973 = smul.u32 16, %s22
        %p974 = scmp.lt.s32.totalorder %s973, 31
        %s975 = scalar_select %p974, %s973, 31
        %s976 = smul.addr %s975, 4
        %s977 = scalar_lea.vmem %s5, %s976
      $region60: #{graphsage_forward.5} parent=55 // pred_fallthru
        _
    $region56: #{graphsage_forward.5} parent=5 // pred_fallthru
      _
  $region6: #{graphsage_forward.5} parent=0 // loop_footer
    %s15 = sadd.s32 1, %s11
  $region7: #{graphsage_forward.5} parent=0 // loop_footer_branch
    %10 = sbr.rel target = $region3
  $region8: #{graphsage_forward.5} parent=0 // loop_exit
    _

</llo_original>
